<compile_context>
chip_gen: v5e
topology: v5e:2x2
jax: 0.10.0
libtpu: 0.0.40
codegen_flags: <defaults>
</compile_context>

<pallas_src>
import math

import jax
import jax.numpy as jnp
from jax.experimental import pallas as pl
from jax.experimental.pallas import tpu as pltpu

_BN_EPS = 1e-5


# ----------------------------------------------------------------------------
# Kernel 1: 3x3 conv (im2col, gated weights) + per-channel sum / sum-of-squares
# ----------------------------------------------------------------------------
def _conv_im2col_kernel(x_ref, w_ref, gate_ref, y_ref, sum_ref, ssq_ref,
                        patch_ref):
    # x_ref:     (1, H+2, W+2, Cin)   zero-padded NHWC image (compute dtype)
    # w_ref:     (TCout, 9*Cin)       f32 weights, columns ordered (kh, kw, ci)
    # gate_ref:  (TCout, 1)           f32 per-output-channel gate
    # y_ref:     (1, TCout, H*W)      f32 conv output (lane axis = H*W)
    # sum_ref:   (TCout, 1)           f32 per-channel running sum   (resident)
    # ssq_ref:   (TCout, 1)           f32 per-channel running sumsq (resident)
    # patch_ref: (H*W, 9*Cin)         compute-dtype im2col scratch
    _, Hp, Wp, Cin = x_ref.shape
    H, W = Hp - 2, Wp - 2
    HW = H * W

    x = x_ref[0]                                          # (Hp, Wp, Cin)
    for kh in range(3):
        for kw in range(3):
            k = kh * 3 + kw
            patch_ref[:, k * Cin:(k + 1) * Cin] = (
                x[kh:kh + H, kw:kw + W, :].reshape(HW, Cin))

    # Gate the weight tile in-kernel (no HBM round trip of W * gate).
    w = (w_ref[...] * gate_ref[...]).astype(patch_ref.dtype)   # (TCout, 9*Cin)

    # Single MXU matmul, K = 9*Cin, channel-major / lane-dense result:
    #   (TCout, 9*Cin) x (H*W, 9*Cin)^T -> (TCout, H*W)
    acc = jax.lax.dot_general(
        w, patch_ref[...],
        dimension_numbers=(((1,), (1,)), ((), ())),
        preferred_element_type=jnp.float32)

    y_ref[0] = acc

    # Batch-statistics accumulation across the batch ("arbitrary") grid axis.
    @pl.when(pl.program_id(1) == 0)
    def _():
        sum_ref[...] = jnp.zeros_like(sum_ref)
        ssq_ref[...] = jnp.zeros_like(ssq_ref)

    sum_ref[...] += jnp.sum(acc, axis=1, keepdims=True)
    ssq_ref[...] += jnp.sum(acc * acc, axis=1, keepdims=True)


# ----------------------------------------------------------------------------
# Kernel 2: fused BatchNorm affine + ReLU (lane-dense, fully parallel grid)
# ----------------------------------------------------------------------------
def _bn_relu_kernel(y_ref, scale_ref, shift_ref, o_ref):
    # y_ref / o_ref: (1, TCout, H*W) ; scale_ref / shift_ref: (TCout, 1)
    y = y_ref[...]
    s = scale_ref[...][None]
    b = shift_ref[...][None]
    o_ref[...] = jnp.maximum(y * s + b, 0.0).astype(o_ref.dtype)


# ----------------------------------------------------------------------------
# Wrappers
# ----------------------------------------------------------------------------
def conv_bn_relu(x_nchw, weights_oihw, gate, gamma, beta,
                 *, compute_dtype=jnp.bfloat16):
    """relu(batchnorm_train(conv2d(x, W * gate, stride=1, padding=1)))."""
    N, Cin, H, W = x_nchw.shape
    Cout = weights_oihw.shape[0]
    HW = H * W

    # Cout tiling: 128-wide tiles (lane width / v5e MXU) when they divide Cout.
    TCout = 128 if Cout % 128 == 0 else Cout
    CB = Cout // TCout

    # NCHW -> NHWC + 1px zero halo; matmul operand cast to bf16.
    # TODO(synk): fold this transpose+pad into the kernel DMA (masked halo
    # loads) to save one HBM round trip of the input.
    x_nhwc = jnp.transpose(x_nchw, (0, 2, 3, 1))
    x_pad = jnp.pad(x_nhwc, ((0, 0), (1, 1), (1, 1), (0, 0))).astype(compute_dtype)

    # (Cout, Cin, 3, 3) -> (Cout, 3, 3, Cin) -> (Cout, 9*Cin); column ordering
    # (kh, kw, cin) matches the im2col patch layout built inside the kernel.
    w_mat = jnp.transpose(weights_oihw, (0, 2, 3, 1)).reshape(Cout, 9 * Cin)
    w_mat = w_mat.astype(jnp.float32)
    gate_col = gate.reshape(Cout, 1).astype(jnp.float32)

    conv_out, ch_sum, ch_ssq = pl.pallas_call(
        _conv_im2col_kernel,
        grid=(CB, N),
        in_specs=[
            pl.BlockSpec((1, H + 2, W + 2, Cin), lambda cb, n: (n, 0, 0, 0)),
            pl.BlockSpec((TCout, 9 * Cin), lambda cb, n: (cb, 0)),
            pl.BlockSpec((TCout, 1), lambda cb, n: (cb, 0)),
        ],
        out_specs=(
            pl.BlockSpec((1, TCout, HW), lambda cb, n: (n, cb, 0)),
            pl.BlockSpec((TCout, 1), lambda cb, n: (cb, 0)),
            pl.BlockSpec((TCout, 1), lambda cb, n: (cb, 0)),
        ),
        out_shape=(
            jax.ShapeDtypeStruct((N, Cout, HW), jnp.float32),
            jax.ShapeDtypeStruct((Cout, 1), jnp.float32),
            jax.ShapeDtypeStruct((Cout, 1), jnp.float32),
        ),
        scratch_shapes=[pltpu.VMEM((HW, 9 * Cin), compute_dtype)],
        compiler_params=pltpu.CompilerParams(
            dimension_semantics=("parallel", "arbitrary")),
    )(x_pad, w_mat, gate_col)

    # Tiny per-channel statistics (biased variance = PyTorch training-mode BN).
    count = jnp.float32(N * HW)
    mean = ch_sum[:, 0] / count
    var = jnp.maximum(ch_ssq[:, 0] / count - mean * mean, 0.0)
    inv_std = jax.lax.rsqrt(var + _BN_EPS)
    g = gamma.astype(jnp.float32)
    scale = (g * inv_std).reshape(Cout, 1)
    shift = (beta.astype(jnp.float32) - mean * g * inv_std).reshape(Cout, 1)
    # TODO(synk): BatchNorm running_mean/running_var buffer updates (PyTorch
    # training side effect) are not modeled; only the normalized output is.

    out = pl.pallas_call(
        _bn_relu_kernel,
        grid=(N, CB),
        in_specs=[
            pl.BlockSpec((1, TCout, HW), lambda n, cb: (n, cb, 0)),
            pl.BlockSpec((TCout, 1), lambda n, cb: (cb, 0)),
            pl.BlockSpec((TCout, 1), lambda n, cb: (cb, 0)),
        ],
        out_specs=pl.BlockSpec((1, TCout, HW), lambda n, cb: (n, cb, 0)),
        out_shape=jax.ShapeDtypeStruct((N, Cout, HW), jnp.float32),
        compiler_params=pltpu.CompilerParams(
            dimension_semantics=("parallel", "parallel")),
    )(conv_out, scale, shift)

    # (N, Cout, H*W) is already NCHW up to a free metadata reshape.
    return out.reshape(N, Cout, H, W)


def weight_mean(weights_oihw):
    """torch.mean(weights.view(Cout, Cin*9), dim=1): a few hundred FLOPs, so
    plain XLA (pallas_call fixed overhead would dominate)."""
    Cout = weights_oihw.shape[0]
    return jnp.mean(weights_oihw.reshape(Cout, -1).astype(jnp.float32), axis=1)


def init_convolution2_params(key, in_features, out_features):
    """kaiming_normal_(mode='fan_out', nonlinearity='relu') + default BN init."""
    fan_out = out_features * 3 * 3
    std = math.sqrt(2.0 / fan_out)
    weights = std * jax.random.normal(
        key, (out_features, in_features, 3, 3), dtype=jnp.float32)
    gamma = jnp.ones((out_features,), jnp.float32)
    beta = jnp.zeros((out_features,), jnp.float32)
    return {"weights": weights, "gamma": gamma, "beta": beta}


def convolution2_forward(params, x, epoch, gate, i):
    """Mirrors Convolution2.forward (the requires_grad toggling is a PyTorch
    autograd concern and has no effect on the forward math)."""
    w, gamma, beta = params["weights"], params["gamma"], params["beta"]
    Cout = w.shape[0]
    if epoch < 4:
        out = conv_bn_relu(x, w, jnp.ones((Cout,), jnp.float32), gamma, beta)
        return out, x
    # epoch >= 4: even and odd branches compute the same values.
    if i == 0:
        return weight_mean(w)
    out = conv_bn_relu(x, w, gate, gamma, beta)
    return out, x


# ----------------------------------------------------------------------------
def _reference_conv_bn_relu(x, w, gate, gamma, beta):
    """Pure-XLA f32 reference for a numerical sanity check."""
    wg = w * gate.reshape(-1, 1, 1, 1)
    conv = jax.lax.conv_general_dilated(
        x, wg, window_strides=(1, 1), padding=((1, 1), (1, 1)),
        dimension_numbers=("NCHW", "OIHW", "NCHW"))
    mean = jnp.mean(conv, axis=(0, 2, 3), keepdims=True)
    var = jnp.mean((conv - mean) ** 2, axis=(0, 2, 3), keepdims=True)
    y = (conv - mean) * jax.lax.rsqrt(var + _BN_EPS)
    y = y * gamma.reshape(1, -1, 1, 1) + beta.reshape(1, -1, 1, 1)
    return jnp.maximum(y, 0.0)


if __name__ == "__main__":
    key = jax.random.PRNGKey(0)
    k_w, k_x, k_g = jax.random.split(key, 3)

    in_features, out_features = 4, 8
    N, H, W = 2, 16, 16

    params = init_convolution2_params(k_w, in_features, out_features)
    x = jax.random.normal(k_x, (N, in_features, H, W), dtype=jnp.float32)
    gate = jax.random.uniform(k_g, (out_features,), dtype=jnp.float32)

    # Path 1: epoch < 4          -> (relu(bn(conv(x, W))), x)
    out_a, in_a = convolution2_forward(params, x, epoch=1, gate=gate, i=1)
    # Path 2: epoch >= 4, i == 0 -> per-output-channel mean of W
    out_b = convolution2_forward(params, x, epoch=4, gate=gate, i=0)
    # Path 3: epoch >= 4, i != 0 -> (relu(bn(conv(x, W * gate))), x)
    out_c, in_c = convolution2_forward(params, x, epoch=5, gate=gate, i=1)

    jax.block_until_ready((out_a, out_b, out_c))
    assert out_a.shape == (N, out_features, H, W)
    assert out_b.shape == (out_features,)
    assert out_c.shape == (N, out_features, H, W)

    # Loose-tolerance check vs. the f32 XLA reference (kernel matmul uses bf16
    # operands with f32 accumulation).
    ref_c = _reference_conv_bn_relu(x, params["weights"], gate,
                                    params["gamma"], params["beta"])
    err = float(jnp.max(jnp.abs(out_c - ref_c)))
    assert err < 1e-1, f"max abs error vs reference too large: {err}"

    ref_b = jnp.mean(params["weights"].reshape(out_features, -1), axis=1)
    assert float(jnp.max(jnp.abs(out_b - ref_b))) < 1e-6

    print("KERNEL_OK")
</pallas_src>

<mosaic_0001>
module attributes {stable_mosaic.version = 11 : i64} {
  func.func @_conv_im2col_kernel(%arg0: i32, %arg1: i32, %arg2: memref<1x18x18x4xbf16, #tpu.memory_space<vmem>>, %arg3: memref<8x36xf32, #tpu.memory_space<vmem>>, %arg4: memref<8x1xf32, #tpu.memory_space<vmem>>, %arg5: memref<1x8x256xf32, #tpu.memory_space<vmem>>, %arg6: memref<8x1xf32, #tpu.memory_space<vmem>>, %arg7: memref<8x1xf32, #tpu.memory_space<vmem>>, %arg8: memref<256x36xbf16, #tpu.memory_space<vmem>>) attributes {dimension_semantics = [#tpu.dimension_semantics<parallel>, #tpu.dimension_semantics<arbitrary>], iteration_bounds = array<i64: 1, 2>, scalar_prefetch = 0 : i64, scratch_operands = 1 : i64, tpu.core_type = #tpu.core_type<tc>, window_params = [{transform_indices = @transform_0, window_bounds = array<i64: 1, 18, 18, 4>}, {transform_indices = @transform_1, window_bounds = array<i64: 8, 36>}, {transform_indices = @transform_2, window_bounds = array<i64: 8, 1>}, {transform_indices = @transform_3, window_bounds = array<i64: 1, 8, 256>}, {transform_indices = @transform_4, window_bounds = array<i64: 8, 1>}, {transform_indices = @transform_5, window_bounds = array<i64: 8, 1>}]} {
    %c0 = arith.constant 0 : index
    %c0_0 = arith.constant 0 : index
    %c0_1 = arith.constant 0 : index
    %c0_2 = arith.constant 0 : index
    %0 = vector.load %arg2[%c0, %c0_0, %c0_1, %c0_2] : memref<1x18x18x4xbf16, #tpu.memory_space<vmem>>, vector<1x18x18x4xbf16>
    %1 = vector.shape_cast %0 : vector<1x18x18x4xbf16> to vector<18x18x4xbf16>
    %2 = vector.extract_strided_slice %1 {offsets = [0, 0, 0], sizes = [16, 16, 4], strides = [1, 1, 1]} : vector<18x18x4xbf16> to vector<16x16x4xbf16>
    %3 = vector.shape_cast %2 : vector<16x16x4xbf16> to vector<256x4xbf16>
    %c0_3 = arith.constant 0 : index
    %c0_4 = arith.constant 0 : index
    %4 = vector.load %arg8[%c0_3, %c0_4] : memref<256x36xbf16, #tpu.memory_space<vmem>>, vector<256x4xbf16>
    tpu.vector_store %arg8[%c0_3, %c0_4], %3 {strides = array<i32>} : memref<256x36xbf16, #tpu.memory_space<vmem>>, vector<256x4xbf16>,
    %5 = vector.extract_strided_slice %1 {offsets = [0, 1, 0], sizes = [16, 16, 4], strides = [1, 1, 1]} : vector<18x18x4xbf16> to vector<16x16x4xbf16>
    %6 = vector.shape_cast %5 : vector<16x16x4xbf16> to vector<256x4xbf16>
    %c0_5 = arith.constant 0 : index
    %c4 = arith.constant 4 : index
    %7 = vector.load %arg8[%c0_5, %c4] : memref<256x36xbf16, #tpu.memory_space<vmem>>, vector<256x4xbf16>
    tpu.vector_store %arg8[%c0_5, %c4], %6 {strides = array<i32>} : memref<256x36xbf16, #tpu.memory_space<vmem>>, vector<256x4xbf16>,
    %8 = vector.extract_strided_slice %1 {offsets = [0, 2, 0], sizes = [16, 16, 4], strides = [1, 1, 1]} : vector<18x18x4xbf16> to vector<16x16x4xbf16>
    %9 = vector.shape_cast %8 : vector<16x16x4xbf16> to vector<256x4xbf16>
    %c0_6 = arith.constant 0 : index
    %c8 = arith.constant 8 : index
    %10 = vector.load %arg8[%c0_6, %c8] : memref<256x36xbf16, #tpu.memory_space<vmem>>, vector<256x4xbf16>
    tpu.vector_store %arg8[%c0_6, %c8], %9 {strides = array<i32>} : memref<256x36xbf16, #tpu.memory_space<vmem>>, vector<256x4xbf16>,
    %11 = vector.extract_strided_slice %1 {offsets = [1, 0, 0], sizes = [16, 16, 4], strides = [1, 1, 1]} : vector<18x18x4xbf16> to vector<16x16x4xbf16>
    %12 = vector.shape_cast %11 : vector<16x16x4xbf16> to vector<256x4xbf16>
    %c0_7 = arith.constant 0 : index
    %c12 = arith.constant 12 : index
    %13 = vector.load %arg8[%c0_7, %c12] : memref<256x36xbf16, #tpu.memory_space<vmem>>, vector<256x4xbf16>
    tpu.vector_store %arg8[%c0_7, %c12], %12 {strides = array<i32>} : memref<256x36xbf16, #tpu.memory_space<vmem>>, vector<256x4xbf16>,
    %14 = vector.extract_strided_slice %1 {offsets = [1, 1, 0], sizes = [16, 16, 4], strides = [1, 1, 1]} : vector<18x18x4xbf16> to vector<16x16x4xbf16>
    %15 = vector.shape_cast %14 : vector<16x16x4xbf16> to vector<256x4xbf16>
    %c0_8 = arith.constant 0 : index
    %c16 = arith.constant 16 : index
    %16 = vector.load %arg8[%c0_8, %c16] : memref<256x36xbf16, #tpu.memory_space<vmem>>, vector<256x4xbf16>
    tpu.vector_store %arg8[%c0_8, %c16], %15 {strides = array<i32>} : memref<256x36xbf16, #tpu.memory_space<vmem>>, vector<256x4xbf16>,
    %17 = vector.extract_strided_slice %1 {offsets = [1, 2, 0], sizes = [16, 16, 4], strides = [1, 1, 1]} : vector<18x18x4xbf16> to vector<16x16x4xbf16>
    %18 = vector.shape_cast %17 : vector<16x16x4xbf16> to vector<256x4xbf16>
    %c0_9 = arith.constant 0 : index
    %c20 = arith.constant 20 : index
    %19 = vector.load %arg8[%c0_9, %c20] : memref<256x36xbf16, #tpu.memory_space<vmem>>, vector<256x4xbf16>
    tpu.vector_store %arg8[%c0_9, %c20], %18 {strides = array<i32>} : memref<256x36xbf16, #tpu.memory_space<vmem>>, vector<256x4xbf16>,
    %20 = vector.extract_strided_slice %1 {offsets = [2, 0, 0], sizes = [16, 16, 4], strides = [1, 1, 1]} : vector<18x18x4xbf16> to vector<16x16x4xbf16>
    %21 = vector.shape_cast %20 : vector<16x16x4xbf16> to vector<256x4xbf16>
    %c0_10 = arith.constant 0 : index
    %c24 = arith.constant 24 : index
    %22 = vector.load %arg8[%c0_10, %c24] : memref<256x36xbf16, #tpu.memory_space<vmem>>, vector<256x4xbf16>
    tpu.vector_store %arg8[%c0_10, %c24], %21 {strides = array<i32>} : memref<256x36xbf16, #tpu.memory_space<vmem>>, vector<256x4xbf16>,
    %23 = vector.extract_strided_slice %1 {offsets = [2, 1, 0], sizes = [16, 16, 4], strides = [1, 1, 1]} : vector<18x18x4xbf16> to vector<16x16x4xbf16>
    %24 = vector.shape_cast %23 : vector<16x16x4xbf16> to vector<256x4xbf16>
    %c0_11 = arith.constant 0 : index
    %c28 = arith.constant 28 : index
    %25 = vector.load %arg8[%c0_11, %c28] : memref<256x36xbf16, #tpu.memory_space<vmem>>, vector<256x4xbf16>
    tpu.vector_store %arg8[%c0_11, %c28], %24 {strides = array<i32>} : memref<256x36xbf16, #tpu.memory_space<vmem>>, vector<256x4xbf16>,
    %26 = vector.extract_strided_slice %1 {offsets = [2, 2, 0], sizes = [16, 16, 4], strides = [1, 1, 1]} : vector<18x18x4xbf16> to vector<16x16x4xbf16>
    %27 = vector.shape_cast %26 : vector<16x16x4xbf16> to vector<256x4xbf16>
    %c0_12 = arith.constant 0 : index
    %c32 = arith.constant 32 : index
    %28 = vector.load %arg8[%c0_12, %c32] : memref<256x36xbf16, #tpu.memory_space<vmem>>, vector<256x4xbf16>
    tpu.vector_store %arg8[%c0_12, %c32], %27 {strides = array<i32>} : memref<256x36xbf16, #tpu.memory_space<vmem>>, vector<256x4xbf16>,
    %c0_13 = arith.constant 0 : index
    %c0_14 = arith.constant 0 : index
    %29 = vector.load %arg3[%c0_13, %c0_14] : memref<8x36xf32, #tpu.memory_space<vmem>>, vector<8x36xf32>
    %c0_15 = arith.constant 0 : index
    %c0_16 = arith.constant 0 : index
    %30 = vector.load %arg4[%c0_15, %c0_16] : memref<8x1xf32, #tpu.memory_space<vmem>>, vector<8x1xf32>
    %31 = vector.broadcast %30 : vector<8x1xf32> to vector<8x36xf32>
    %32 = arith.mulf %29, %31 : vector<8x36xf32>
    %33 = arith.truncf %32 : vector<8x36xf32> to vector<8x36xbf16>
    %c0_17 = arith.constant 0 : index
    %c0_18 = arith.constant 0 : index
    %34 = vector.load %arg8[%c0_17, %c0_18] : memref<256x36xbf16, #tpu.memory_space<vmem>>, vector<256x36xbf16>
    %cst = arith.constant dense<0.000000e+00> : vector<8x256xf32>
    %35 = tpu.matmul %33, %34, %cst {dimension_numbers = #tpu.dot_dimension_numbers<[1], [1], [0], [0], [0, 0, 1, 0], [], []>} : vector<8x36xbf16>, vector<256x36xbf16>, vector<8x256xf32> -> vector<8x256xf32>
    %c0_19 = arith.constant 0 : index
    %c0_20 = arith.constant 0 : index
    %c0_21 = arith.constant 0 : index
    %36 = vector.load %arg5[%c0_19, %c0_20, %c0_21] : memref<1x8x256xf32, #tpu.memory_space<vmem>>, vector<1x8x256xf32>
    %37 = vector.shape_cast %36 : vector<1x8x256xf32> to vector<8x256xf32>
    %38 = vector.shape_cast %35 : vector<8x256xf32> to vector<1x8x256xf32>
    tpu.vector_store %arg5[%c0_19, %c0_20, %c0_21], %38 {strides = array<i32>} : memref<1x8x256xf32, #tpu.memory_space<vmem>>, vector<1x8x256xf32>,
    %c0_i32 = arith.constant 0 : i32
    %39 = arith.cmpi eq, %arg1, %c0_i32 : i32
    %40 = arith.extui %39 : i1 to i32
    %c0_i32_22 = arith.constant 0 : i32
    %41 = arith.cmpi ne, %40, %c0_i32_22 : i32
    scf.if %41 {
      %cst_33 = arith.constant 0.000000e+00 : f32
      %53 = vector.broadcast %cst_33 : f32 to vector<8x1xf32>
      %c0_34 = arith.constant 0 : index
      %c0_35 = arith.constant 0 : index
      %54 = vector.load %arg6[%c0_34, %c0_35] : memref<8x1xf32, #tpu.memory_space<vmem>>, vector<8x1xf32>
      tpu.vector_store %arg6[%c0_34, %c0_35], %53 {strides = array<i32>} : memref<8x1xf32, #tpu.memory_space<vmem>>, vector<8x1xf32>,
      %cst_36 = arith.constant 0.000000e+00 : f32
      %55 = vector.broadcast %cst_36 : f32 to vector<8x1xf32>
      %c0_37 = arith.constant 0 : index
      %c0_38 = arith.constant 0 : index
      %56 = vector.load %arg7[%c0_37, %c0_38] : memref<8x1xf32, #tpu.memory_space<vmem>>, vector<8x1xf32>
      tpu.vector_store %arg7[%c0_37, %c0_38], %55 {strides = array<i32>} : memref<8x1xf32, #tpu.memory_space<vmem>>, vector<8x1xf32>,
    } else {
    }
    %c0_23 = arith.constant 0 : index
    %c0_24 = arith.constant 0 : index
    %42 = vector.load %arg6[%c0_23, %c0_24] : memref<8x1xf32, #tpu.memory_space<vmem>>, vector<8x1xf32>
    %cst_25 = arith.constant dense<0.000000e+00> : vector<8xf32>
    %43 = vector.multi_reduction <add>, %35, %cst_25 [1] : vector<8x256xf32> to vector<8xf32>
    %44 = vector.shape_cast %43 : vector<8xf32> to vector<8x1xf32>
    %45 = arith.addf %42, %44 : vector<8x1xf32>
    %c0_26 = arith.constant 0 : index
    %c0_27 = arith.constant 0 : index
    %46 = vector.load %arg6[%c0_26, %c0_27] : memref<8x1xf32, #tpu.memory_space<vmem>>, vector<8x1xf32>
    tpu.vector_store %arg6[%c0_26, %c0_27], %45 {strides = array<i32>} : memref<8x1xf32, #tpu.memory_space<vmem>>, vector<8x1xf32>,
    %c0_28 = arith.constant 0 : index
    %c0_29 = arith.constant 0 : index
    %47 = vector.load %arg7[%c0_28, %c0_29] : memref<8x1xf32, #tpu.memory_space<vmem>>, vector<8x1xf32>
    %48 = arith.mulf %35, %35 : vector<8x256xf32>
    %cst_30 = arith.constant dense<0.000000e+00> : vector<8xf32>
    %49 = vector.multi_reduction <add>, %48, %cst_30 [1] : vector<8x256xf32> to vector<8xf32>
    %50 = vector.shape_cast %49 : vector<8xf32> to vector<8x1xf32>
    %51 = arith.addf %47, %50 : vector<8x1xf32>
    %c0_31 = arith.constant 0 : index
    %c0_32 = arith.constant 0 : index
    %52 = vector.load %arg7[%c0_31, %c0_32] : memref<8x1xf32, #tpu.memory_space<vmem>>, vector<8x1xf32>
    tpu.vector_store %arg7[%c0_31, %c0_32], %51 {strides = array<i32>} : memref<8x1xf32, #tpu.memory_space<vmem>>, vector<8x1xf32>,
    return
  }
  func.func @transform_0(%arg0: i32, %arg1: i32) -> (i32, i32, i32, i32) {
    %c0_i32 = arith.constant 0 : i32
    %c0_i32_0 = arith.constant 0 : i32
    %c0_i32_1 = arith.constant 0 : i32
    %c0_i32_2 = arith.constant 0 : i32
    return %arg1, %c0_i32, %c0_i32_0, %c0_i32_1 : i32, i32, i32, i32
  }
  func.func @transform_1(%arg0: i32, %arg1: i32) -> (i32, i32) {
    %c0_i32 = arith.constant 0 : i32
    %c0_i32_0 = arith.constant 0 : i32
    return %arg0, %c0_i32 : i32, i32
  }
  func.func @transform_2(%arg0: i32, %arg1: i32) -> (i32, i32) {
    %c0_i32 = arith.constant 0 : i32
    %c0_i32_0 = arith.constant 0 : i32
    return %arg0, %c0_i32 : i32, i32
  }
  func.func @transform_3(%arg0: i32, %arg1: i32) -> (i32, i32, i32) {
    %c0_i32 = arith.constant 0 : i32
    %c0_i32_0 = arith.constant 0 : i32
    return %arg1, %arg0, %c0_i32 : i32, i32, i32
  }
  func.func @transform_4(%arg0: i32, %arg1: i32) -> (i32, i32) {
    %c0_i32 = arith.constant 0 : i32
    %c0_i32_0 = arith.constant 0 : i32
    return %arg0, %c0_i32 : i32, i32
  }
  func.func @transform_5(%arg0: i32, %arg1: i32) -> (i32, i32) {
    %c0_i32 = arith.constant 0 : i32
    %c0_i32_0 = arith.constant 0 : i32
    return %arg0, %c0_i32 : i32, i32
  }
}

</mosaic_0001>

<llo_original>
// kernel: tpu_custom_call.1
$region0: #{tpu_custom_call.1}
  #allocation0 [shape = 'u32[]', space=smem, size = 0x4, offset = 0x4, fixed_abs, tag = 'smem constant byte address 0x4 - core index']
  #allocation1 [shape = 'u32[72,128]{1,0:T(1,128)}', space=vmem, size = 0x9000, scoped, tag = 'internal scratch']
  #allocation2 [shape = 'bf16[256,36]{1,0:T(8,128)(2,1)}', space=vmem, size = 0x10000, scoped, tag = 'scratch operand']
  %s0 = inlined_call_operand.vmem [shape: bf16[2,18,18,4], index: 0, kind: input, shape index: {}]
  %s1 = inlined_call_operand.vmem [shape: f32[8,36], index: 1, kind: input, shape index: {}]
  %s2 = inlined_call_operand.vmem [shape: f32[8,1], index: 2, kind: input, shape index: {}]
  %s3 = inlined_call_operand.hbm [shape: f32[2,8,256], index: 3, kind: output, shape index: {0}]
  %s4 = inlined_call_operand.vmem [shape: f32[8,1], index: 4, kind: output, shape index: {1}]
  %s5 = inlined_call_operand.vmem [shape: f32[8,1], index: 5, kind: output, shape index: {2}]
  %6 = xla_tuple %s3, %s4, %s5
  %s7 = sld [smem:[#allocation0]]
  $region65: #{tpu_custom_call.1} parent=0
    _
  %s9 = ssub.s32 1, %s7
  %s10 = scalar_select 0, %s9, %s7
  $region1: #{tpu_custom_call.1} parent=0
    #allocation3 [shape = 'u8[16384]{0}', space=vmem, size = 0x4000, scoped, tag = 'output window, operand 0']
    #allocation4 [shape = 's32[2]{0}', space=sflag, size = 0x8, scoped, tag = 'scoped memory for tpu_custom_call.1']
    %11 = vsyncpa [#allocation4], 0
    %s12 = scalar_lea.sflag [#allocation4], 1
    %13 = vsyncpa %s12, 0
    loop: start=0, step=1, limit=4
    $region2: #{tpu_custom_call.1} parent=1 // loop_pre_header
      _
    $region3: #{tpu_custom_call.1} parent=1 // loop_header
      %s15 = sphi 0, %s19
      %p16 = scmp.ge.s32.totalorder %s15, 4
      %s22 = sphi 0, %s34
      %s23 = sphi 0, %s30
      %s24 = sphi 0, %s22
      %s25 = sphi 0, %s23
      %s26 = sphi 0, %s24
      %s27 = sphi 0, %s25
      %s37 = sphi 0, %s39
      %s40 = sphi 0, %s37
      %s41 = sphi 0, %s40
      %s57 = sphi 0, %s41
      %s63 = sphi 0, %s65
      %s66 = sphi 0, %s63
      %s67 = sphi 0, %s66
      %s83 = sphi 0, %s67
      %s89 = sphi 0, %s91
      %s92 = sphi 0, %s89
      %s93 = sphi 0, %s92
      %s109 = sphi 0, %s93
      %s117 = sphi 0, %s119
      %s120 = sphi 0, %s117
      %s121 = sphi 0, %s120
      %s137 = sphi 0, %s121
      %s143 = sphi 0, %s145
      %s146 = sphi 0, %s143
      %s147 = sphi 0, %s146
      %s163 = sphi 0, %s147
      %s169 = sphi 0, %s171
      %s172 = sphi 0, %s169
      %s173 = sphi 0, %s172
      %s189 = sphi 0, %s173
    $region4: #{tpu_custom_call.1} parent=1 // loop_header_branch
      %18 = sbr.rel (%p16) target = $region8
    $region5: #{tpu_custom_call.1} parent=1 // loop_body
      %s20 = ssub.s32 %s15, 1
      %s21 = ssub.s32 %s15, 2
      %s28 = sadd.s32 1, %s23
      %p29 = scmp.ge.s32.totalorder %s28, 2
      %s30 = scalar_select %p29, 0, %s28
      %s31 = sadd.s32 1, %s22
      %s32 = scalar_select %p29, %s31, %s22
      %p33 = scmp.ge.s32.totalorder %s32, 1
      %s34 = scalar_select %p33, 0, %s32
      %s35 = ssub.s32 %s23, %s30
      %p36 = scmp.eq.s32.totalorder %s35, 0
      %s38 = sadd.s32 %s37, 1
      %s39 = scalar_select %p36, %s37, %s38
      %p42 = pneg %p36
      %p43 = scmp.eq.s32.totalorder %s15, 1
      %p44 = por %p42, %p43
      %p45 = scmp.ne.s32.totalorder %s37, %s40
      %p46 = scmp.eq.s32.totalorder %s15, 0
      %p47 = por %p45, %p46
      %p48 = scmp.ne.s32.totalorder %s37, %s40
      %p49 = scmp.eq.s32.totalorder %s20, 1
      %p50 = por %p48, %p49
      %p51 = scmp.ne.s32.totalorder %s40, %s41
      %p52 = scmp.eq.s32.totalorder %s20, 0
      %p53 = por %p51, %p52
      %p54 = scmp.ne.s32.totalorder %s40, %s41
      %p55 = scmp.eq.s32.totalorder %s21, 1
      %p56 = por %p54, %p55
      %p58 = scmp.ne.s32.totalorder %s41, %s57
      %p59 = scmp.eq.s32.totalorder %s21, 0
      %p60 = por %p58, %p59
      %s61 = ssub.s32 %s22, %s34
      %p62 = scmp.eq.s32.totalorder %s61, 0
      %s64 = sadd.s32 %s63, 1
      %s65 = scalar_select %p62, %s63, %s64
      %p68 = pneg %p62
      %p69 = scmp.eq.s32.totalorder %s15, 1
      %p70 = por %p68, %p69
      %p71 = scmp.ne.s32.totalorder %s63, %s66
      %p72 = scmp.eq.s32.totalorder %s15, 0
      %p73 = por %p71, %p72
      %p74 = scmp.ne.s32.totalorder %s63, %s66
      %p75 = scmp.eq.s32.totalorder %s20, 1
      %p76 = por %p74, %p75
      %p77 = scmp.ne.s32.totalorder %s66, %s67
      %p78 = scmp.eq.s32.totalorder %s20, 0
      %p79 = por %p77, %p78
      %p80 = scmp.ne.s32.totalorder %s66, %s67
      %p81 = scmp.eq.s32.totalorder %s21, 1
      %p82 = por %p80, %p81
      %p84 = scmp.ne.s32.totalorder %s67, %s83
      %p85 = scmp.eq.s32.totalorder %s21, 0
      %p86 = por %p84, %p85
      %s87 = ssub.s32 %s22, %s34
      %p88 = scmp.eq.s32.totalorder %s87, 0
      %s90 = sadd.s32 %s89, 1
      %s91 = scalar_select %p88, %s89, %s90
      %p94 = pneg %p88
      %p95 = scmp.eq.s32.totalorder %s15, 1
      %p96 = por %p94, %p95
      %p97 = scmp.ne.s32.totalorder %s89, %s92
      %p98 = scmp.eq.s32.totalorder %s15, 0
      %p99 = por %p97, %p98
      %p100 = scmp.ne.s32.totalorder %s89, %s92
      %p101 = scmp.eq.s32.totalorder %s20, 1
      %p102 = por %p100, %p101
      %p103 = scmp.ne.s32.totalorder %s92, %s93
      %p104 = scmp.eq.s32.totalorder %s20, 0
      %p105 = por %p103, %p104
      %p106 = scmp.ne.s32.totalorder %s92, %s93
      %p107 = scmp.eq.s32.totalorder %s21, 1
      %p108 = por %p106, %p107
      %p110 = scmp.ne.s32.totalorder %s93, %s109
      %p111 = scmp.eq.s32.totalorder %s21, 0
      %p112 = por %p110, %p111
      %s113 = ssub.s32 %s23, %s30
      %s114 = ssub.s32 %s22, %s34
      %s115 = sor.u32 %s113, %s114
      %p116 = scmp.eq.s32.totalorder %s115, 0
      %s118 = sadd.s32 %s117, 1
      %s119 = scalar_select %p116, %s117, %s118
      %p122 = pneg %p116
      %p123 = scmp.eq.s32.totalorder %s15, 1
      %p124 = por %p122, %p123
      %p125 = scmp.ne.s32.totalorder %s117, %s120
      %p126 = scmp.eq.s32.totalorder %s15, 0
      %p127 = por %p125, %p126
      %p128 = scmp.ne.s32.totalorder %s117, %s120
      %p129 = scmp.eq.s32.totalorder %s20, 1
      %p130 = por %p128, %p129
      %p131 = scmp.ne.s32.totalorder %s120, %s121
      %p132 = scmp.eq.s32.totalorder %s20, 0
      %p133 = por %p131, %p132
      %p134 = scmp.ne.s32.totalorder %s120, %s121
      %p135 = scmp.eq.s32.totalorder %s21, 1
      %p136 = por %p134, %p135
      %p138 = scmp.ne.s32.totalorder %s121, %s137
      %p139 = scmp.eq.s32.totalorder %s21, 0
      %p140 = por %p138, %p139
      %s141 = ssub.s32 %s22, %s34
      %p142 = scmp.eq.s32.totalorder %s141, 0
      %s144 = sadd.s32 %s143, 1
      %s145 = scalar_select %p142, %s143, %s144
      %p148 = pneg %p142
      %p149 = scmp.eq.s32.totalorder %s15, 1
      %p150 = por %p148, %p149
      %p151 = scmp.ne.s32.totalorder %s143, %s146
      %p152 = scmp.eq.s32.totalorder %s15, 0
      %p153 = por %p151, %p152
      %p154 = scmp.ne.s32.totalorder %s143, %s146
      %p155 = scmp.eq.s32.totalorder %s20, 1
      %p156 = por %p154, %p155
      %p157 = scmp.ne.s32.totalorder %s146, %s147
      %p158 = scmp.eq.s32.totalorder %s20, 0
      %p159 = por %p157, %p158
      %p160 = scmp.ne.s32.totalorder %s146, %s147
      %p161 = scmp.eq.s32.totalorder %s21, 1
      %p162 = por %p160, %p161
      %p164 = scmp.ne.s32.totalorder %s147, %s163
      %p165 = scmp.eq.s32.totalorder %s21, 0
      %p166 = por %p164, %p165
      %s167 = ssub.s32 %s22, %s34
      %p168 = scmp.eq.s32.totalorder %s167, 0
      %s170 = sadd.s32 %s169, 1
      %s171 = scalar_select %p168, %s169, %s170
      %p174 = pneg %p168
      %p175 = scmp.eq.s32.totalorder %s15, 1
      %p176 = por %p174, %p175
      %p177 = scmp.ne.s32.totalorder %s169, %s172
      %p178 = scmp.eq.s32.totalorder %s15, 0
      %p179 = por %p177, %p178
      %p180 = scmp.ne.s32.totalorder %s169, %s172
      %p181 = scmp.eq.s32.totalorder %s20, 1
      %p182 = por %p180, %p181
      %p183 = scmp.ne.s32.totalorder %s172, %s173
      %p184 = scmp.eq.s32.totalorder %s20, 0
      %p185 = por %p183, %p184
      %p186 = scmp.ne.s32.totalorder %s172, %s173
      %p187 = scmp.eq.s32.totalorder %s21, 1
      %p188 = por %p186, %p187
      %p190 = scmp.ne.s32.totalorder %s173, %s189
      %p191 = scmp.eq.s32.totalorder %s21, 0
      %p192 = por %p190, %p191
      %p193 = scmp.le.s32.totalorder 1, %s15
      %p194 = scmp.lt.s32.totalorder %s15, 3
      %p195 = pnand %p193, %p194
      %p196 = pneg %p195
      // Predicated region
      $region9: #{tpu_custom_call.1} parent=5 // pred_check
        _
      $region10: #{tpu_custom_call.1} parent=5 // pred_check_branch
        %198 = sbr.rel (%p195) target = $region12
      $region11: #{tpu_custom_call.1} parent=5 // pred_region
        %s199 = ssub.s32 %s15, 1
        // Predicated region
        $region13: #{tpu_custom_call.1} parent=11 // pred_check
          %p200 = pneg %p79
        $region14: #{tpu_custom_call.1} parent=11 // pred_check_branch
          %202 = sbr.rel (%p200) target = $region16
        $region15: #{tpu_custom_call.1} parent=11 // pred_region
          %p203 = scmp.lt.s32.totalorder %s24, 0
          %s204 = scalar_select %p203, %s24, 0
          %s205 = smul.addr %s204, 8
          %s206 = scalar_lea.vmem %s1, %s205
        $region16: #{tpu_custom_call.1} parent=11 // pred_fallthru
          _
        // Predicated region
        $region17: #{tpu_custom_call.1} parent=11 // pred_check
          %p207 = pneg %p105
        $region18: #{tpu_custom_call.1} parent=11 // pred_check_branch
          %209 = sbr.rel (%p207) target = $region20
        $region19: #{tpu_custom_call.1} parent=11 // pred_region
          %p210 = scmp.lt.s32.totalorder %s24, 0
          %s211 = scalar_select %p210, %s24, 0
          %s212 = smul.addr %s211, 8
          %s213 = scalar_lea.vmem %s2, %s212
        $region20: #{tpu_custom_call.1} parent=11 // pred_fallthru
          _
      $region12: #{tpu_custom_call.1} parent=5 // pred_fallthru
        _
      %p214 = scmp.lt.s32.totalorder %s15, 2
      // Predicated region
      $region21: #{tpu_custom_call.1} parent=5 // pred_check
        %p215 = pneg %p214
      $region22: #{tpu_custom_call.1} parent=5 // pred_check_branch
        %217 = sbr.rel (%p215) target = $region24
      $region23: #{tpu_custom_call.1} parent=5 // pred_region
        // Predicated region
        $region25: #{tpu_custom_call.1} parent=23 // pred_check
          %p218 = pneg %p47
        $region26: #{tpu_custom_call.1} parent=23 // pred_check_branch
          %220 = sbr.rel (%p218) target = $region28
        $region27: #{tpu_custom_call.1} parent=23 // pred_region
          %p221 = scmp.lt.s32.totalorder %s23, 1
          %s222 = scalar_select %p221, %s23, 1
          %s223 = smul.addr %s222, 54
          %s224 = smul.addr %s223, 4
          %s225 = scalar_lea.vmem %s0, %s224
        $region28: #{tpu_custom_call.1} parent=23 // pred_fallthru
          _
      $region24: #{tpu_custom_call.1} parent=5 // pred_fallthru
        _
      %p226 = scmp.le.s32.totalorder 1, %s15
      %p227 = scmp.lt.s32.totalorder %s15, 3
      %p228 = pnand %p226, %p227
      %p229 = pneg %p228
      // Predicated region
      $region29: #{tpu_custom_call.1} parent=5 // pred_check
        _
      $region30: #{tpu_custom_call.1} parent=5 // pred_check_branch
        %231 = sbr.rel (%p228) target = $region32
      $region31: #{tpu_custom_call.1} parent=5 // pred_region
        %s232 = ssub.s32 %s15, 1
        %p233 = scmp.lt.s32.totalorder %s25, 1
        %s234 = scalar_select %p233, %s25, 1
        %s235 = smul.addr %s234, 54
        %s236 = smul.addr %s235, 4
        %s237 = scalar_lea.vmem %s0, %s236
        %p238 = pneg %p53
        %p239 = pneg %p50
        %p240 = scmp.lt.s32.totalorder %s24, 0
        %s241 = scalar_select %p240, %s24, 0
        %s242 = smul.addr %s241, 8
        %s243 = scalar_lea.vmem %s1, %s242
        %p244 = pneg %p79
        %p245 = pneg %p76
        %p246 = scmp.lt.s32.totalorder %s24, 0
        %s247 = scalar_select %p246, %s24, 0
        %s248 = smul.addr %s247, 8
        %s249 = scalar_lea.vmem %s2, %s248
        %p250 = pneg %p105
        %p251 = pneg %p102
        %p252 = pneg %p133
        %p253 = pneg %p130
        %s254 = sand.u32 %s120, 1
        %s255 = scalar_lea.sflag [#allocation4], %s254
        %s256 = sand.u32 %s120, 1
        %s257 = smul.addr %s256, 16
        %s258 = scalar_lea.vmem [#allocation3], %s257
        %p259 = pneg %p159
        %p260 = pneg %p156
        %p261 = scmp.lt.s32.totalorder %s24, 0
        %s262 = scalar_select %p261, %s24, 0
        %s263 = smul.addr %s262, 8
        %s264 = scalar_lea.vmem %s4, %s263
        %p265 = pneg %p185
        %p266 = pneg %p182
        %p267 = scmp.lt.s32.totalorder %s24, 0
        %s268 = scalar_select %p267, %s24, 0
        %s269 = smul.addr %s268, 8
        %s270 = scalar_lea.vmem %s5, %s269
        %p271 = scmp.lt.s32.totalorder %s25, 1
        %s272 = scalar_select %p271, %s25, 1
        %s273 = smul.addr %s272, 54
        %s274 = smul.addr %s273, 4
        %s275 = scalar_lea.vmem %s0, %s274
        %p276 = scmp.lt.s32.totalorder %s24, 0
        %s277 = scalar_select %p276, %s24, 0
        %s278 = smul.addr %s277, 8
        %s279 = scalar_lea.vmem %s1, %s278
        %p280 = scmp.lt.s32.totalorder %s24, 0
        %s281 = scalar_select %p280, %s24, 0
        %s282 = smul.addr %s281, 8
        %s283 = scalar_lea.vmem %s2, %s282
        %p284 = scmp.lt.s32.totalorder %s24, 0
        %s285 = scalar_select %p284, %s24, 0
        %s286 = smul.addr %s285, 8
        %s287 = scalar_lea.vmem %s4, %s286
        %p288 = scmp.lt.s32.totalorder %s24, 0
        %s289 = scalar_select %p288, %s24, 0
        %s290 = smul.addr %s289, 8
        %s291 = scalar_lea.vmem %s5, %s290
        %v292 = vld [vmem:[%s275] sm:$0xf]
        %v293 = vld [vmem:[%s275 + $0x4] sm:$0xf]
        %v294 = vld [vmem:[%s275 + $0x8] sm:$0x1]
        %v295 = vld [vmem:[%s275 + $0xc] sm:$0xf]
        %v296 = vld [vmem:[%s275 + $0x10] sm:$0xf]
        %v297 = vld [vmem:[%s275 + $0x14] sm:$0x1]
        %v298 = vld [vmem:[%s275 + $0x18] sm:$0xf]
        %v299 = vld [vmem:[%s275 + $0x1c] sm:$0xf]
        %v300 = vld [vmem:[%s275 + $0x20] sm:$0x1]
        %v301 = vld [vmem:[%s275 + $0x24] sm:$0xf]
        %v302 = vld [vmem:[%s275 + $0x28] sm:$0xf]
        %v303 = vld [vmem:[%s275 + $0x2c] sm:$0x1]
        %v304 = vld [vmem:[%s275 + $0x30] sm:$0xf]
        %v305 = vld [vmem:[%s275 + $0x34] sm:$0xf]
        %v306 = vld [vmem:[%s275 + $0x38] sm:$0x1]
        %v307 = vld [vmem:[%s275 + $0x3c] sm:$0xf]
        %v308 = vld [vmem:[%s275 + $0x40] sm:$0xf]
        %v309 = vld [vmem:[%s275 + $0x44] sm:$0x1]
        %v310 = vld [vmem:[%s275 + $0x48] sm:$0xf]
        %v311 = vld [vmem:[%s275 + $0x4c] sm:$0xf]
        %v312 = vld [vmem:[%s275 + $0x50] sm:$0x1]
        %v313 = vld [vmem:[%s275 + $0x54] sm:$0xf]
        %v314 = vld [vmem:[%s275 + $0x58] sm:$0xf]
        %v315 = vld [vmem:[%s275 + $0x5c] sm:$0x1]
        %v316 = vld [vmem:[%s275 + $0x60] sm:$0xf]
        %v317 = vld [vmem:[%s275 + $0x64] sm:$0xf]
        %v318 = vld [vmem:[%s275 + $0x68] sm:$0x1]
        %v319 = vld [vmem:[%s275 + $0x6c] sm:$0xf]
        %v320 = vld [vmem:[%s275 + $0x70] sm:$0xf]
        %v321 = vld [vmem:[%s275 + $0x74] sm:$0x1]
        %v322 = vld [vmem:[%s275 + $0x78] sm:$0xf]
        %v323 = vld [vmem:[%s275 + $0x7c] sm:$0xf]
        %v324 = vld [vmem:[%s275 + $0x80] sm:$0x1]
        %v325 = vld [vmem:[%s275 + $0x84] sm:$0xf]
        %v326 = vld [vmem:[%s275 + $0x88] sm:$0xf]
        %v327 = vld [vmem:[%s275 + $0x8c] sm:$0x1]
        %v328 = vld [vmem:[%s275 + $0x90] sm:$0xf]
        %v329 = vld [vmem:[%s275 + $0x94] sm:$0xf]
        %v330 = vld [vmem:[%s275 + $0x98] sm:$0x1]
        %v331 = vld [vmem:[%s275 + $0x9c] sm:$0xf]
        %v332 = vld [vmem:[%s275 + $0xa0] sm:$0xf]
        %v333 = vld [vmem:[%s275 + $0xa4] sm:$0x1]
        %v334 = vld [vmem:[%s275 + $0xa8] sm:$0xf]
        %v335 = vld [vmem:[%s275 + $0xac] sm:$0xf]
        %v336 = vld [vmem:[%s275 + $0xb0] sm:$0x1]
        %v337 = vld [vmem:[%s275 + $0xb4] sm:$0xf]
        %v338 = vld [vmem:[%s275 + $0xb8] sm:$0xf]
        %v339 = vld [vmem:[%s275 + $0xbc] sm:$0x1]
        %v340 = vld [vmem:[%s275 + $0xc0] sm:$0xf]
        %v341 = vld [vmem:[%s275 + $0xc4] sm:$0xf]
        %v342 = vld [vmem:[%s275 + $0xc8] sm:$0x1]
        %v343 = vld [vmem:[%s275 + $0xcc] sm:$0xf]
        %v344 = vld [vmem:[%s275 + $0xd0] sm:$0xf]
        %v345 = vld [vmem:[%s275 + $0xd4] sm:$0x1]
        %vm346 = vcmask 27648
        %347 = vst.msk [vmem:[#allocation2] sm:$0xf] %vm346, %v292
        %348 = vst.msk [vmem:[#allocation2 + $0x4] sm:$0xf] %vm346, %v293
        %349 = vst.msk [vmem:[#allocation2 + $0x8] sm:$0xf] %vm346, %v295
        %350 = vst.msk [vmem:[#allocation2 + $0xc] sm:$0xf] %vm346, %v296
        %351 = vst.msk [vmem:[#allocation2 + $0x10] sm:$0xf] %vm346, %v298
        %352 = vst.msk [vmem:[#allocation2 + $0x14] sm:$0xf] %vm346, %v299
        %353 = vst.msk [vmem:[#allocation2 + $0x18] sm:$0xf] %vm346, %v301
        %354 = vst.msk [vmem:[#allocation2 + $0x1c] sm:$0xf] %vm346, %v302
        %355 = vst.msk [vmem:[#allocation2 + $0x20] sm:$0xf] %vm346, %v304
        %356 = vst.msk [vmem:[#allocation2 + $0x24] sm:$0xf] %vm346, %v305
        %357 = vst.msk [vmem:[#allocation2 + $0x28] sm:$0xf] %vm346, %v307
        %358 = vst.msk [vmem:[#allocation2 + $0x2c] sm:$0xf] %vm346, %v308
        %359 = vst.msk [vmem:[#allocation2 + $0x30] sm:$0xf] %vm346, %v310
        %360 = vst.msk [vmem:[#allocation2 + $0x34] sm:$0xf] %vm346, %v311
        %361 = vst.msk [vmem:[#allocation2 + $0x38] sm:$0xf] %vm346, %v313
        %362 = vst.msk [vmem:[#allocation2 + $0x3c] sm:$0xf] %vm346, %v314
        %363 = vst.msk [vmem:[#allocation2 + $0x40] sm:$0xf] %vm346, %v316
        %364 = vst.msk [vmem:[#allocation2 + $0x44] sm:$0xf] %vm346, %v317
        %365 = vst.msk [vmem:[#allocation2 + $0x48] sm:$0xf] %vm346, %v319
        %366 = vst.msk [vmem:[#allocation2 + $0x4c] sm:$0xf] %vm346, %v320
        %367 = vst.msk [vmem:[#allocation2 + $0x50] sm:$0xf] %vm346, %v322
        %368 = vst.msk [vmem:[#allocation2 + $0x54] sm:$0xf] %vm346, %v323
        %369 = vst.msk [vmem:[#allocation2 + $0x58] sm:$0xf] %vm346, %v325
        %370 = vst.msk [vmem:[#allocation2 + $0x5c] sm:$0xf] %vm346, %v326
        %371 = vst.msk [vmem:[#allocation2 + $0x60] sm:$0xf] %vm346, %v328
        %372 = vst.msk [vmem:[#allocation2 + $0x64] sm:$0xf] %vm346, %v329
        %373 = vst.msk [vmem:[#allocation2 + $0x68] sm:$0xf] %vm346, %v331
        %374 = vst.msk [vmem:[#allocation2 + $0x6c] sm:$0xf] %vm346, %v332
        %375 = vst.msk [vmem:[#allocation2 + $0x70] sm:$0xf] %vm346, %v334
        %376 = vst.msk [vmem:[#allocation2 + $0x74] sm:$0xf] %vm346, %v335
        %377 = vst.msk [vmem:[#allocation2 + $0x78] sm:$0xf] %vm346, %v337
        %378 = vst.msk [vmem:[#allocation2 + $0x7c] sm:$0xf] %vm346, %v338
        %vm379 = vsmask.f32 3328
        %vm380 = vsmask.f32 7440
        %vm381 = vmor %vm379, %vm380
        %v383 = vshrl.u32 %v292, 16
        %v385 = vrot.slane %v383, 4
        %v386 = vshll.u32 %v292, 16
        %v388 = vrot.slane %v386, 5
        %v389 = vor.u32 %v385, %v388
        %v390 = vrot.slane %v389, 4
        %v392 = vshll.u32 %v293, 16
        %v394 = vrot.slane %v392, 5
        %v395 = vsel %vm381, %v390, %v394
        %v396 = vshrl.u32 %v293, 16
        %v398 = vrot.slane %v396, 4
        %v399 = vor.u32 %v398, %v394
        %v400 = vrot.slane %v399, 4
        %v402 = vshll.u32 %v294, 16
        %v404 = vrot.slane %v402, 5
        %v405 = vsel %vm381, %v400, %v404
        %v407 = vshrl.u32 %v295, 16
        %v409 = vrot.slane %v407, 4
        %v410 = vshll.u32 %v295, 16
        %v412 = vrot.slane %v410, 5
        %v413 = vor.u32 %v409, %v412
        %v414 = vrot.slane %v413, 4
        %v416 = vshll.u32 %v296, 16
        %v418 = vrot.slane %v416, 5
        %v419 = vsel %vm381, %v414, %v418
        %v420 = vshrl.u32 %v296, 16
        %v422 = vrot.slane %v420, 4
        %v423 = vor.u32 %v422, %v418
        %v424 = vrot.slane %v423, 4
        %v426 = vshll.u32 %v297, 16
        %v428 = vrot.slane %v426, 5
        %v429 = vsel %vm381, %v424, %v428
        %v431 = vshrl.u32 %v298, 16
        %v433 = vrot.slane %v431, 4
        %v434 = vshll.u32 %v298, 16
        %v436 = vrot.slane %v434, 5
        %v437 = vor.u32 %v433, %v436
        %v438 = vrot.slane %v437, 4
        %v440 = vshll.u32 %v299, 16
        %v442 = vrot.slane %v440, 5
        %v443 = vsel %vm381, %v438, %v442
        %v444 = vshrl.u32 %v299, 16
        %v446 = vrot.slane %v444, 4
        %v447 = vor.u32 %v446, %v442
        %v448 = vrot.slane %v447, 4
        %v450 = vshll.u32 %v300, 16
        %v452 = vrot.slane %v450, 5
        %v453 = vsel %vm381, %v448, %v452
        %v455 = vshrl.u32 %v301, 16
        %v457 = vrot.slane %v455, 4
        %v458 = vshll.u32 %v301, 16
        %v460 = vrot.slane %v458, 5
        %v461 = vor.u32 %v457, %v460
        %v462 = vrot.slane %v461, 4
        %v464 = vshll.u32 %v302, 16
        %v466 = vrot.slane %v464, 5
        %v467 = vsel %vm381, %v462, %v466
        %v468 = vshrl.u32 %v302, 16
        %v470 = vrot.slane %v468, 4
        %v471 = vor.u32 %v470, %v466
        %v472 = vrot.slane %v471, 4
        %v474 = vshll.u32 %v303, 16
        %v476 = vrot.slane %v474, 5
        %v477 = vsel %vm381, %v472, %v476
        %v479 = vshrl.u32 %v304, 16
        %v481 = vrot.slane %v479, 4
        %v482 = vshll.u32 %v304, 16
        %v484 = vrot.slane %v482, 5
        %v485 = vor.u32 %v481, %v484
        %v486 = vrot.slane %v485, 4
        %v488 = vshll.u32 %v305, 16
        %v490 = vrot.slane %v488, 5
        %v491 = vsel %vm381, %v486, %v490
        %v492 = vshrl.u32 %v305, 16
        %v494 = vrot.slane %v492, 4
        %v495 = vor.u32 %v494, %v490
        %v496 = vrot.slane %v495, 4
        %v498 = vshll.u32 %v306, 16
        %v500 = vrot.slane %v498, 5
        %v501 = vsel %vm381, %v496, %v500
        %v503 = vshrl.u32 %v307, 16
        %v505 = vrot.slane %v503, 4
        %v506 = vshll.u32 %v307, 16
        %v508 = vrot.slane %v506, 5
        %v509 = vor.u32 %v505, %v508
        %v510 = vrot.slane %v509, 4
        %v512 = vshll.u32 %v308, 16
        %v514 = vrot.slane %v512, 5
        %v515 = vsel %vm381, %v510, %v514
        %v516 = vshrl.u32 %v308, 16
        %v518 = vrot.slane %v516, 4
        %v519 = vor.u32 %v518, %v514
        %v520 = vrot.slane %v519, 4
        %v522 = vshll.u32 %v309, 16
        %v524 = vrot.slane %v522, 5
        %v525 = vsel %vm381, %v520, %v524
        %v527 = vshrl.u32 %v310, 16
        %v529 = vrot.slane %v527, 4
        %v530 = vshll.u32 %v310, 16
        %v532 = vrot.slane %v530, 5
        %v533 = vor.u32 %v529, %v532
        %v534 = vrot.slane %v533, 4
        %v536 = vshll.u32 %v311, 16
        %v538 = vrot.slane %v536, 5
        %v539 = vsel %vm381, %v534, %v538
        %v540 = vshrl.u32 %v311, 16
        %v542 = vrot.slane %v540, 4
        %v543 = vor.u32 %v542, %v538
        %v544 = vrot.slane %v543, 4
        %v546 = vshll.u32 %v312, 16
        %v548 = vrot.slane %v546, 5
        %v549 = vsel %vm381, %v544, %v548
        %v551 = vshrl.u32 %v313, 16
        %v553 = vrot.slane %v551, 4
        %v554 = vshll.u32 %v313, 16
        %v556 = vrot.slane %v554, 5
        %v557 = vor.u32 %v553, %v556
        %v558 = vrot.slane %v557, 4
        %v560 = vshll.u32 %v314, 16
        %v562 = vrot.slane %v560, 5
        %v563 = vsel %vm381, %v558, %v562
        %v564 = vshrl.u32 %v314, 16
        %v566 = vrot.slane %v564, 4
        %v567 = vor.u32 %v566, %v562
        %v568 = vrot.slane %v567, 4
        %v570 = vshll.u32 %v315, 16
        %v572 = vrot.slane %v570, 5
        %v573 = vsel %vm381, %v568, %v572
        %v575 = vshrl.u32 %v316, 16
        %v577 = vrot.slane %v575, 4
        %v578 = vshll.u32 %v316, 16
        %v580 = vrot.slane %v578, 5
        %v581 = vor.u32 %v577, %v580
        %v582 = vrot.slane %v581, 4
        %v584 = vshll.u32 %v317, 16
        %v586 = vrot.slane %v584, 5
        %v587 = vsel %vm381, %v582, %v586
        %v588 = vshrl.u32 %v317, 16
        %v590 = vrot.slane %v588, 4
        %v591 = vor.u32 %v590, %v586
        %v592 = vrot.slane %v591, 4
        %v594 = vshll.u32 %v318, 16
        %v596 = vrot.slane %v594, 5
        %v597 = vsel %vm381, %v592, %v596
        %v599 = vshrl.u32 %v319, 16
        %v601 = vrot.slane %v599, 4
        %v602 = vshll.u32 %v319, 16
        %v604 = vrot.slane %v602, 5
        %v605 = vor.u32 %v601, %v604
        %v606 = vrot.slane %v605, 4
        %v608 = vshll.u32 %v320, 16
        %v610 = vrot.slane %v608, 5
        %v611 = vsel %vm381, %v606, %v610
        %v612 = vshrl.u32 %v320, 16
        %v614 = vrot.slane %v612, 4
        %v615 = vor.u32 %v614, %v610
        %v616 = vrot.slane %v615, 4
        %v618 = vshll.u32 %v321, 16
        %v620 = vrot.slane %v618, 5
        %v621 = vsel %vm381, %v616, %v620
        %v623 = vshrl.u32 %v322, 16
        %v625 = vrot.slane %v623, 4
        %v626 = vshll.u32 %v322, 16
        %v628 = vrot.slane %v626, 5
        %v629 = vor.u32 %v625, %v628
        %v630 = vrot.slane %v629, 4
        %v632 = vshll.u32 %v323, 16
        %v634 = vrot.slane %v632, 5
        %v635 = vsel %vm381, %v630, %v634
        %v636 = vshrl.u32 %v323, 16
        %v638 = vrot.slane %v636, 4
        %v639 = vor.u32 %v638, %v634
        %v640 = vrot.slane %v639, 4
        %v642 = vshll.u32 %v324, 16
        %v644 = vrot.slane %v642, 5
        %v645 = vsel %vm381, %v640, %v644
        %v647 = vshrl.u32 %v325, 16
        %v649 = vrot.slane %v647, 4
        %v650 = vshll.u32 %v325, 16
        %v652 = vrot.slane %v650, 5
        %v653 = vor.u32 %v649, %v652
        %v654 = vrot.slane %v653, 4
        %v656 = vshll.u32 %v326, 16
        %v658 = vrot.slane %v656, 5
        %v659 = vsel %vm381, %v654, %v658
        %v660 = vshrl.u32 %v326, 16
        %v662 = vrot.slane %v660, 4
        %v663 = vor.u32 %v662, %v658
        %v664 = vrot.slane %v663, 4
        %v666 = vshll.u32 %v327, 16
        %v668 = vrot.slane %v666, 5
        %v669 = vsel %vm381, %v664, %v668
        %v671 = vshrl.u32 %v328, 16
        %v673 = vrot.slane %v671, 4
        %v674 = vshll.u32 %v328, 16
        %v676 = vrot.slane %v674, 5
        %v677 = vor.u32 %v673, %v676
        %v678 = vrot.slane %v677, 4
        %v680 = vshll.u32 %v329, 16
        %v682 = vrot.slane %v680, 5
        %v683 = vsel %vm381, %v678, %v682
        %v684 = vshrl.u32 %v329, 16
        %v686 = vrot.slane %v684, 4
        %v687 = vor.u32 %v686, %v682
        %v688 = vrot.slane %v687, 4
        %v690 = vshll.u32 %v330, 16
        %v692 = vrot.slane %v690, 5
        %v693 = vsel %vm381, %v688, %v692
        %v695 = vshrl.u32 %v331, 16
        %v697 = vrot.slane %v695, 4
        %v698 = vshll.u32 %v331, 16
        %v700 = vrot.slane %v698, 5
        %v701 = vor.u32 %v697, %v700
        %v702 = vrot.slane %v701, 4
        %v704 = vshll.u32 %v332, 16
        %v706 = vrot.slane %v704, 5
        %v707 = vsel %vm381, %v702, %v706
        %v708 = vshrl.u32 %v332, 16
        %v710 = vrot.slane %v708, 4
        %v711 = vor.u32 %v710, %v706
        %v712 = vrot.slane %v711, 4
        %v714 = vshll.u32 %v333, 16
        %v716 = vrot.slane %v714, 5
        %v717 = vsel %vm381, %v712, %v716
        %v719 = vshrl.u32 %v334, 16
        %v721 = vrot.slane %v719, 4
        %v722 = vshll.u32 %v334, 16
        %v724 = vrot.slane %v722, 5
        %v725 = vor.u32 %v721, %v724
        %v726 = vrot.slane %v725, 4
        %v728 = vshll.u32 %v335, 16
        %v730 = vrot.slane %v728, 5
        %v731 = vsel %vm381, %v726, %v730
        %v732 = vshrl.u32 %v335, 16
        %v734 = vrot.slane %v732, 4
        %v735 = vor.u32 %v734, %v730
        %v736 = vrot.slane %v735, 4
        %v738 = vshll.u32 %v336, 16
        %v740 = vrot.slane %v738, 5
        %v741 = vsel %vm381, %v736, %v740
        %v743 = vshrl.u32 %v337, 16
        %v745 = vrot.slane %v743, 4
        %v746 = vshll.u32 %v337, 16
        %v748 = vrot.slane %v746, 5
        %v749 = vor.u32 %v745, %v748
        %v750 = vrot.slane %v749, 4
        %v752 = vshll.u32 %v338, 16
        %v754 = vrot.slane %v752, 5
        %v755 = vsel %vm381, %v750, %v754
        %v756 = vshrl.u32 %v338, 16
        %v758 = vrot.slane %v756, 4
        %v759 = vor.u32 %v758, %v754
        %v760 = vrot.slane %v759, 4
        %v762 = vshll.u32 %v339, 16
        %v764 = vrot.slane %v762, 5
        %v765 = vsel %vm381, %v760, %v764
        %766 = vrot.lane.b32.xlu0 %v395, 4
        %v767 = vpop.permute.xlu0 %766
        %768 = vrot.lane.b32.xlu0 %v405, 4
        %v769 = vpop.permute.xlu0 %768
        %770 = vrot.lane.b32.xlu0 %v419, 4
        %v771 = vpop.permute.xlu0 %770
        %772 = vrot.lane.b32.xlu0 %v429, 4
        %v773 = vpop.permute.xlu0 %772
        %774 = vrot.lane.b32.xlu0 %v443, 4
        %v775 = vpop.permute.xlu0 %774
        %776 = vrot.lane.b32.xlu0 %v453, 4
        %v777 = vpop.permute.xlu0 %776
        %778 = vrot.lane.b32.xlu0 %v467, 4
        %v779 = vpop.permute.xlu0 %778
        %780 = vrot.lane.b32.xlu0 %v477, 4
        %v781 = vpop.permute.xlu0 %780
        %782 = vrot.lane.b32.xlu0 %v491, 4
        %v783 = vpop.permute.xlu0 %782
        %784 = vrot.lane.b32.xlu0 %v501, 4
        %v785 = vpop.permute.xlu0 %784
        %786 = vrot.lane.b32.xlu0 %v515, 4
        %v787 = vpop.permute.xlu0 %786
        %788 = vrot.lane.b32.xlu0 %v525, 4
        %v789 = vpop.permute.xlu0 %788
        %790 = vrot.lane.b32.xlu0 %v539, 4
        %v791 = vpop.permute.xlu0 %790
        %792 = vrot.lane.b32.xlu0 %v549, 4
        %v793 = vpop.permute.xlu0 %792
        %794 = vrot.lane.b32.xlu0 %v563, 4
        %v795 = vpop.permute.xlu0 %794
        %796 = vrot.lane.b32.xlu0 %v573, 4
        %v797 = vpop.permute.xlu0 %796
        %798 = vrot.lane.b32.xlu0 %v587, 4
        %v799 = vpop.permute.xlu0 %798
        %800 = vrot.lane.b32.xlu0 %v597, 4
        %v801 = vpop.permute.xlu0 %800
        %802 = vrot.lane.b32.xlu0 %v611, 4
        %v803 = vpop.permute.xlu0 %802
        %804 = vrot.lane.b32.xlu0 %v621, 4
        %v805 = vpop.permute.xlu0 %804
        %806 = vrot.lane.b32.xlu0 %v635, 4
        %v807 = vpop.permute.xlu0 %806
        %808 = vrot.lane.b32.xlu0 %v645, 4
        %v809 = vpop.permute.xlu0 %808
        %810 = vrot.lane.b32.xlu0 %v659, 4
        %v811 = vpop.permute.xlu0 %810
        %812 = vrot.lane.b32.xlu0 %v669, 4
        %v813 = vpop.permute.xlu0 %812
        %814 = vrot.lane.b32.xlu0 %v683, 4
        %v815 = vpop.permute.xlu0 %814
        %816 = vrot.lane.b32.xlu0 %v693, 4
        %v817 = vpop.permute.xlu0 %816
        %818 = vrot.lane.b32.xlu0 %v707, 4
        %v819 = vpop.permute.xlu0 %818
        %820 = vrot.lane.b32.xlu0 %v717, 4
        %v821 = vpop.permute.xlu0 %820
        %822 = vrot.lane.b32.xlu0 %v731, 4
        %v823 = vpop.permute.xlu0 %822
        %824 = vrot.lane.b32.xlu0 %v741, 4
        %v825 = vpop.permute.xlu0 %824
        %826 = vrot.lane.b32.xlu0 %v755, 4
        %v827 = vpop.permute.xlu0 %826
        %828 = vrot.lane.b32.xlu0 %v765, 4
        %v829 = vpop.permute.xlu0 %828
        %vm862 = vcmask 60448
        %863 = vst.msk [vmem:[#allocation2] sm:$0xf] %vm862, %v767
        %864 = vst.msk [vmem:[#allocation2 + $0x4] sm:$0xf] %vm862, %v769
        %865 = vst.msk [vmem:[#allocation2 + $0x8] sm:$0xf] %vm862, %v771
        %866 = vst.msk [vmem:[#allocation2 + $0xc] sm:$0xf] %vm862, %v773
        %867 = vst.msk [vmem:[#allocation2 + $0x10] sm:$0xf] %vm862, %v775
        %868 = vst.msk [vmem:[#allocation2 + $0x14] sm:$0xf] %vm862, %v777
        %869 = vst.msk [vmem:[#allocation2 + $0x18] sm:$0xf] %vm862, %v779
        %870 = vst.msk [vmem:[#allocation2 + $0x1c] sm:$0xf] %vm862, %v781
        %871 = vst.msk [vmem:[#allocation2 + $0x20] sm:$0xf] %vm862, %v783
        %872 = vst.msk [vmem:[#allocation2 + $0x24] sm:$0xf] %vm862, %v785
        %873 = vst.msk [vmem:[#allocation2 + $0x28] sm:$0xf] %vm862, %v787
        %874 = vst.msk [vmem:[#allocation2 + $0x2c] sm:$0xf] %vm862, %v789
        %875 = vst.msk [vmem:[#allocation2 + $0x30] sm:$0xf] %vm862, %v791
        %876 = vst.msk [vmem:[#allocation2 + $0x34] sm:$0xf] %vm862, %v793
        %877 = vst.msk [vmem:[#allocation2 + $0x38] sm:$0xf] %vm862, %v795
        %878 = vst.msk [vmem:[#allocation2 + $0x3c] sm:$0xf] %vm862, %v797
        %879 = vst.msk [vmem:[#allocation2 + $0x40] sm:$0xf] %vm862, %v799
        %880 = vst.msk [vmem:[#allocation2 + $0x44] sm:$0xf] %vm862, %v801
        %881 = vst.msk [vmem:[#allocation2 + $0x48] sm:$0xf] %vm862, %v803
        %882 = vst.msk [vmem:[#allocation2 + $0x4c] sm:$0xf] %vm862, %v805
        %883 = vst.msk [vmem:[#allocation2 + $0x50] sm:$0xf] %vm862, %v807
        %884 = vst.msk [vmem:[#allocation2 + $0x54] sm:$0xf] %vm862, %v809
        %885 = vst.msk [vmem:[#allocation2 + $0x58] sm:$0xf] %vm862, %v811
        %886 = vst.msk [vmem:[#allocation2 + $0x5c] sm:$0xf] %vm862, %v813
        %887 = vst.msk [vmem:[#allocation2 + $0x60] sm:$0xf] %vm862, %v815
        %888 = vst.msk [vmem:[#allocation2 + $0x64] sm:$0xf] %vm862, %v817
        %889 = vst.msk [vmem:[#allocation2 + $0x68] sm:$0xf] %vm862, %v819
        %890 = vst.msk [vmem:[#allocation2 + $0x6c] sm:$0xf] %vm862, %v821
        %891 = vst.msk [vmem:[#allocation2 + $0x70] sm:$0xf] %vm862, %v823
        %892 = vst.msk [vmem:[#allocation2 + $0x74] sm:$0xf] %vm862, %v825
        %893 = vst.msk [vmem:[#allocation2 + $0x78] sm:$0xf] %vm862, %v827
        %894 = vst.msk [vmem:[#allocation2 + $0x7c] sm:$0xf] %vm862, %v829
        %vm943 = vcmask 1042432
        %vm944 = vcmask 1046532
        %vm945 = vmor %vm943, %vm944
        %v946 = vrot.slane %v292, 5
        %v947 = vrot.slane %v946, 4
        %v948 = vrot.slane %v293, 5
        %v949 = vsel %vm945, %v947, %v948
        %v950 = vrot.slane %v948, 4
        %v951 = vrot.slane %v294, 5
        %v952 = vsel %vm945, %v950, %v951
        %v953 = vrot.slane %v295, 5
        %v954 = vrot.slane %v953, 4
        %v955 = vrot.slane %v296, 5
        %v956 = vsel %vm945, %v954, %v955
        %v957 = vrot.slane %v955, 4
        %v958 = vrot.slane %v297, 5
        %v959 = vsel %vm945, %v957, %v958
        %v960 = vrot.slane %v298, 5
        %v961 = vrot.slane %v960, 4
        %v962 = vrot.slane %v299, 5
        %v963 = vsel %vm945, %v961, %v962
        %v964 = vrot.slane %v962, 4
        %v965 = vrot.slane %v300, 5
        %v966 = vsel %vm945, %v964, %v965
        %v967 = vrot.slane %v301, 5
        %v968 = vrot.slane %v967, 4
        %v969 = vrot.slane %v302, 5
        %v970 = vsel %vm945, %v968, %v969
        %v971 = vrot.slane %v969, 4
        %v972 = vrot.slane %v303, 5
        %v973 = vsel %vm945, %v971, %v972
        %v974 = vrot.slane %v304, 5
        %v975 = vrot.slane %v974, 4
        %v976 = vrot.slane %v305, 5
        %v977 = vsel %vm945, %v975, %v976
        %v978 = vrot.slane %v976, 4
        %v979 = vrot.slane %v306, 5
        %v980 = vsel %vm945, %v978, %v979
        %v981 = vrot.slane %v307, 5
        %v982 = vrot.slane %v981, 4
        %v983 = vrot.slane %v308, 5
        %v984 = vsel %vm945, %v982, %v983
        %v985 = vrot.slane %v983, 4
        %v986 = vrot.slane %v309, 5
        %v987 = vsel %vm945, %v985, %v986
        %v988 = vrot.slane %v310, 5
        %v989 = vrot.slane %v988, 4
        %v990 = vrot.slane %v311, 5
        %v991 = vsel %vm945, %v989, %v990
        %v992 = vrot.slane %v990, 4
        %v993 = vrot.slane %v312, 5
        %v994 = vsel %vm945, %v992, %v993
        %v995 = vrot.slane %v313, 5
        %v996 = vrot.slane %v995, 4
        %v997 = vrot.slane %v314, 5
        %v998 = vsel %vm945, %v996, %v997
        %v999 = vrot.slane %v997, 4
        %v1000 = vrot.slane %v315, 5
        %v1001 = vsel %vm945, %v999, %v1000
        %v1002 = vrot.slane %v316, 5
        %v1003 = vrot.slane %v1002, 4
        %v1004 = vrot.slane %v317, 5
        %v1005 = vsel %vm945, %v1003, %v1004
        %v1006 = vrot.slane %v1004, 4
        %v1007 = vrot.slane %v318, 5
        %v1008 = vsel %vm945, %v1006, %v1007
        %v1009 = vrot.slane %v319, 5
        %v1010 = vrot.slane %v1009, 4
        %v1011 = vrot.slane %v320, 5
        %v1012 = vsel %vm945, %v1010, %v1011
        %v1013 = vrot.slane %v1011, 4
        %v1014 = vrot.slane %v321, 5
        %v1015 = vsel %vm945, %v1013, %v1014
        %v1016 = vrot.slane %v322, 5
        %v1017 = vrot.slane %v1016, 4
        %v1018 = vrot.slane %v323, 5
        %v1019 = vsel %vm945, %v1017, %v1018
        %v1020 = vrot.slane %v1018, 4
        %v1021 = vrot.slane %v324, 5
        %v1022 = vsel %vm945, %v1020, %v1021
        %v1023 = vrot.slane %v325, 5
        %v1024 = vrot.slane %v1023, 4
        %v1025 = vrot.slane %v326, 5
        %v1026 = vsel %vm945, %v1024, %v1025
        %v1027 = vrot.slane %v1025, 4
        %v1028 = vrot.slane %v327, 5
        %v1029 = vsel %vm945, %v1027, %v1028
        %v1030 = vrot.slane %v328, 5
        %v1031 = vrot.slane %v1030, 4
        %v1032 = vrot.slane %v329, 5
        %v1033 = vsel %vm945, %v1031, %v1032
        %v1034 = vrot.slane %v1032, 4
        %v1035 = vrot.slane %v330, 5
        %v1036 = vsel %vm945, %v1034, %v1035
        %v1037 = vrot.slane %v331, 5
        %v1038 = vrot.slane %v1037, 4
        %v1039 = vrot.slane %v332, 5
        %v1040 = vsel %vm945, %v1038, %v1039
        %v1041 = vrot.slane %v1039, 4
        %v1042 = vrot.slane %v333, 5
        %v1043 = vsel %vm945, %v1041, %v1042
        %v1044 = vrot.slane %v334, 5
        %v1045 = vrot.slane %v1044, 4
        %v1046 = vrot.slane %v335, 5
        %v1047 = vsel %vm945, %v1045, %v1046
        %v1048 = vrot.slane %v1046, 4
        %v1049 = vrot.slane %v336, 5
        %v1050 = vsel %vm945, %v1048, %v1049
        %v1051 = vrot.slane %v337, 5
        %v1052 = vrot.slane %v1051, 4
        %v1053 = vrot.slane %v338, 5
        %v1054 = vsel %vm945, %v1052, %v1053
        %v1055 = vrot.slane %v1053, 4
        %v1056 = vrot.slane %v339, 5
        %v1057 = vsel %vm945, %v1055, %v1056
        %1058 = vrot.lane.b32.xlu0 %v949, 8
        %v1059 = vpop.permute.xlu0 %1058
        %1060 = vrot.lane.b32.xlu0 %v952, 8
        %v1061 = vpop.permute.xlu0 %1060
        %1062 = vrot.lane.b32.xlu0 %v956, 8
        %v1063 = vpop.permute.xlu0 %1062
        %1064 = vrot.lane.b32.xlu0 %v959, 8
        %v1065 = vpop.permute.xlu0 %1064
        %1066 = vrot.lane.b32.xlu0 %v963, 8
        %v1067 = vpop.permute.xlu0 %1066
        %1068 = vrot.lane.b32.xlu0 %v966, 8
        %v1069 = vpop.permute.xlu0 %1068
        %1070 = vrot.lane.b32.xlu0 %v970, 8
        %v1071 = vpop.permute.xlu0 %1070
        %1072 = vrot.lane.b32.xlu0 %v973, 8
        %v1073 = vpop.permute.xlu0 %1072
        %1074 = vrot.lane.b32.xlu0 %v977, 8
        %v1075 = vpop.permute.xlu0 %1074
        %1076 = vrot.lane.b32.xlu0 %v980, 8
        %v1077 = vpop.permute.xlu0 %1076
        %1078 = vrot.lane.b32.xlu0 %v984, 8
        %v1079 = vpop.permute.xlu0 %1078
        %1080 = vrot.lane.b32.xlu0 %v987, 8
        %v1081 = vpop.permute.xlu0 %1080
        %1082 = vrot.lane.b32.xlu0 %v991, 8
        %v1083 = vpop.permute.xlu0 %1082
        %1084 = vrot.lane.b32.xlu0 %v994, 8
        %v1085 = vpop.permute.xlu0 %1084
        %1086 = vrot.lane.b32.xlu0 %v998, 8
        %v1087 = vpop.permute.xlu0 %1086
        %1088 = vrot.lane.b32.xlu0 %v1001, 8
        %v1089 = vpop.permute.xlu0 %1088
        %1090 = vrot.lane.b32.xlu0 %v1005, 8
        %v1091 = vpop.permute.xlu0 %1090
        %1092 = vrot.lane.b32.xlu0 %v1008, 8
        %v1093 = vpop.permute.xlu0 %1092
        %1094 = vrot.lane.b32.xlu0 %v1012, 8
        %v1095 = vpop.permute.xlu0 %1094
        %1096 = vrot.lane.b32.xlu0 %v1015, 8
        %v1097 = vpop.permute.xlu0 %1096
        %1098 = vrot.lane.b32.xlu0 %v1019, 8
        %v1099 = vpop.permute.xlu0 %1098
        %1100 = vrot.lane.b32.xlu0 %v1022, 8
        %v1101 = vpop.permute.xlu0 %1100
        %1102 = vrot.lane.b32.xlu0 %v1026, 8
        %v1103 = vpop.permute.xlu0 %1102
        %1104 = vrot.lane.b32.xlu0 %v1029, 8
        %v1105 = vpop.permute.xlu0 %1104
        %1106 = vrot.lane.b32.xlu0 %v1033, 8
        %v1107 = vpop.permute.xlu0 %1106
        %1108 = vrot.lane.b32.xlu0 %v1036, 8
        %v1109 = vpop.permute.xlu0 %1108
        %1110 = vrot.lane.b32.xlu0 %v1040, 8
        %v1111 = vpop.permute.xlu0 %1110
        %1112 = vrot.lane.b32.xlu0 %v1043, 8
        %v1113 = vpop.permute.xlu0 %1112
        %1114 = vrot.lane.b32.xlu0 %v1047, 8
        %v1115 = vpop.permute.xlu0 %1114
        %1116 = vrot.lane.b32.xlu0 %v1050, 8
        %v1117 = vpop.permute.xlu0 %1116
        %1118 = vrot.lane.b32.xlu0 %v1054, 8
        %v1119 = vpop.permute.xlu0 %1118
        %1120 = vrot.lane.b32.xlu0 %v1057, 8
        %v1121 = vpop.permute.xlu0 %1120
        %vm1154 = vcmask 93248
        %1155 = vst.msk [vmem:[#allocation2] sm:$0xf] %vm1154, %v1059
        %1156 = vst.msk [vmem:[#allocation2 + $0x4] sm:$0xf] %vm1154, %v1061
        %1157 = vst.msk [vmem:[#allocation2 + $0x8] sm:$0xf] %vm1154, %v1063
        %1158 = vst.msk [vmem:[#allocation2 + $0xc] sm:$0xf] %vm1154, %v1065
        %1159 = vst.msk [vmem:[#allocation2 + $0x10] sm:$0xf] %vm1154, %v1067
        %1160 = vst.msk [vmem:[#allocation2 + $0x14] sm:$0xf] %vm1154, %v1069
        %1161 = vst.msk [vmem:[#allocation2 + $0x18] sm:$0xf] %vm1154, %v1071
        %1162 = vst.msk [vmem:[#allocation2 + $0x1c] sm:$0xf] %vm1154, %v1073
        %1163 = vst.msk [vmem:[#allocation2 + $0x20] sm:$0xf] %vm1154, %v1075
        %1164 = vst.msk [vmem:[#allocation2 + $0x24] sm:$0xf] %vm1154, %v1077
        %1165 = vst.msk [vmem:[#allocation2 + $0x28] sm:$0xf] %vm1154, %v1079
        %1166 = vst.msk [vmem:[#allocation2 + $0x2c] sm:$0xf] %vm1154, %v1081
        %1167 = vst.msk [vmem:[#allocation2 + $0x30] sm:$0xf] %vm1154, %v1083
        %1168 = vst.msk [vmem:[#allocation2 + $0x34] sm:$0xf] %vm1154, %v1085
        %1169 = vst.msk [vmem:[#allocation2 + $0x38] sm:$0xf] %vm1154, %v1087
        %1170 = vst.msk [vmem:[#allocation2 + $0x3c] sm:$0xf] %vm1154, %v1089
        %1171 = vst.msk [vmem:[#allocation2 + $0x40] sm:$0xf] %vm1154, %v1091
        %1172 = vst.msk [vmem:[#allocation2 + $0x44] sm:$0xf] %vm1154, %v1093
        %1173 = vst.msk [vmem:[#allocation2 + $0x48] sm:$0xf] %vm1154, %v1095
        %1174 = vst.msk [vmem:[#allocation2 + $0x4c] sm:$0xf] %vm1154, %v1097
        %1175 = vst.msk [vmem:[#allocation2 + $0x50] sm:$0xf] %vm1154, %v1099
        %1176 = vst.msk [vmem:[#allocation2 + $0x54] sm:$0xf] %vm1154, %v1101
        %1177 = vst.msk [vmem:[#allocation2 + $0x58] sm:$0xf] %vm1154, %v1103
        %1178 = vst.msk [vmem:[#allocation2 + $0x5c] sm:$0xf] %vm1154, %v1105
        %1179 = vst.msk [vmem:[#allocation2 + $0x60] sm:$0xf] %vm1154, %v1107
        %1180 = vst.msk [vmem:[#allocation2 + $0x64] sm:$0xf] %vm1154, %v1109
        %1181 = vst.msk [vmem:[#allocation2 + $0x68] sm:$0xf] %vm1154, %v1111
        %1182 = vst.msk [vmem:[#allocation2 + $0x6c] sm:$0xf] %vm1154, %v1113
        %1183 = vst.msk [vmem:[#allocation2 + $0x70] sm:$0xf] %vm1154, %v1115
        %1184 = vst.msk [vmem:[#allocation2 + $0x74] sm:$0xf] %vm1154, %v1117
        %1185 = vst.msk [vmem:[#allocation2 + $0x78] sm:$0xf] %vm1154, %v1119
        %1186 = vst.msk [vmem:[#allocation2 + $0x7c] sm:$0xf] %vm1154, %v1121
        %1189 = vrot.lane.b32.xlu0 %v295, 12
        %v1190 = vpop.permute.xlu0 %1189
        %1191 = vrot.lane.b32.xlu0 %v296, 12
        %v1192 = vpop.permute.xlu0 %1191
        %1193 = vrot.lane.b32.xlu0 %v298, 12
        %v1194 = vpop.permute.xlu0 %1193
        %1195 = vrot.lane.b32.xlu0 %v299, 12
        %v1196 = vpop.permute.xlu0 %1195
        %1197 = vrot.lane.b32.xlu0 %v301, 12
        %v1198 = vpop.permute.xlu0 %1197
        %1199 = vrot.lane.b32.xlu0 %v302, 12
        %v1200 = vpop.permute.xlu0 %1199
        %1201 = vrot.lane.b32.xlu0 %v304, 12
        %v1202 = vpop.permute.xlu0 %1201
        %1203 = vrot.lane.b32.xlu0 %v305, 12
        %v1204 = vpop.permute.xlu0 %1203
        %1205 = vrot.lane.b32.xlu0 %v307, 12
        %v1206 = vpop.permute.xlu0 %1205
        %1207 = vrot.lane.b32.xlu0 %v308, 12
        %v1208 = vpop.permute.xlu0 %1207
        %1209 = vrot.lane.b32.xlu0 %v310, 12
        %v1210 = vpop.permute.xlu0 %1209
        %1211 = vrot.lane.b32.xlu0 %v311, 12
        %v1212 = vpop.permute.xlu0 %1211
        %1213 = vrot.lane.b32.xlu0 %v313, 12
        %v1214 = vpop.permute.xlu0 %1213
        %1215 = vrot.lane.b32.xlu0 %v314, 12
        %v1216 = vpop.permute.xlu0 %1215
        %1217 = vrot.lane.b32.xlu0 %v316, 12
        %v1218 = vpop.permute.xlu0 %1217
        %1219 = vrot.lane.b32.xlu0 %v317, 12
        %v1220 = vpop.permute.xlu0 %1219
        %1221 = vrot.lane.b32.xlu0 %v319, 12
        %v1222 = vpop.permute.xlu0 %1221
        %1223 = vrot.lane.b32.xlu0 %v320, 12
        %v1224 = vpop.permute.xlu0 %1223
        %1225 = vrot.lane.b32.xlu0 %v322, 12
        %v1226 = vpop.permute.xlu0 %1225
        %1227 = vrot.lane.b32.xlu0 %v323, 12
        %v1228 = vpop.permute.xlu0 %1227
        %1229 = vrot.lane.b32.xlu0 %v325, 12
        %v1230 = vpop.permute.xlu0 %1229
        %1231 = vrot.lane.b32.xlu0 %v326, 12
        %v1232 = vpop.permute.xlu0 %1231
        %1233 = vrot.lane.b32.xlu0 %v328, 12
        %v1234 = vpop.permute.xlu0 %1233
        %1235 = vrot.lane.b32.xlu0 %v329, 12
        %v1236 = vpop.permute.xlu0 %1235
        %1237 = vrot.lane.b32.xlu0 %v331, 12
        %v1238 = vpop.permute.xlu0 %1237
        %1239 = vrot.lane.b32.xlu0 %v332, 12
        %v1240 = vpop.permute.xlu0 %1239
        %1241 = vrot.lane.b32.xlu0 %v334, 12
        %v1242 = vpop.permute.xlu0 %1241
        %1243 = vrot.lane.b32.xlu0 %v335, 12
        %v1244 = vpop.permute.xlu0 %1243
        %1245 = vrot.lane.b32.xlu0 %v337, 12
        %v1246 = vpop.permute.xlu0 %1245
        %1247 = vrot.lane.b32.xlu0 %v338, 12
        %v1248 = vpop.permute.xlu0 %1247
        %1249 = vrot.lane.b32.xlu0 %v340, 12
        %v1250 = vpop.permute.xlu0 %1249
        %1251 = vrot.lane.b32.xlu0 %v341, 12
        %v1252 = vpop.permute.xlu0 %1251
        %vm1285 = vcmask 126048
        %1286 = vst.msk [vmem:[#allocation2] sm:$0xf] %vm1285, %v1190
        %1287 = vst.msk [vmem:[#allocation2 + $0x4] sm:$0xf] %vm1285, %v1192
        %1288 = vst.msk [vmem:[#allocation2 + $0x8] sm:$0xf] %vm1285, %v1194
        %1289 = vst.msk [vmem:[#allocation2 + $0xc] sm:$0xf] %vm1285, %v1196
        %1290 = vst.msk [vmem:[#allocation2 + $0x10] sm:$0xf] %vm1285, %v1198
        %1291 = vst.msk [vmem:[#allocation2 + $0x14] sm:$0xf] %vm1285, %v1200
        %1292 = vst.msk [vmem:[#allocation2 + $0x18] sm:$0xf] %vm1285, %v1202
        %1293 = vst.msk [vmem:[#allocation2 + $0x1c] sm:$0xf] %vm1285, %v1204
        %1294 = vst.msk [vmem:[#allocation2 + $0x20] sm:$0xf] %vm1285, %v1206
        %1295 = vst.msk [vmem:[#allocation2 + $0x24] sm:$0xf] %vm1285, %v1208
        %1296 = vst.msk [vmem:[#allocation2 + $0x28] sm:$0xf] %vm1285, %v1210
        %1297 = vst.msk [vmem:[#allocation2 + $0x2c] sm:$0xf] %vm1285, %v1212
        %1298 = vst.msk [vmem:[#allocation2 + $0x30] sm:$0xf] %vm1285, %v1214
        %1299 = vst.msk [vmem:[#allocation2 + $0x34] sm:$0xf] %vm1285, %v1216
        %1300 = vst.msk [vmem:[#allocation2 + $0x38] sm:$0xf] %vm1285, %v1218
        %1301 = vst.msk [vmem:[#allocation2 + $0x3c] sm:$0xf] %vm1285, %v1220
        %1302 = vst.msk [vmem:[#allocation2 + $0x40] sm:$0xf] %vm1285, %v1222
        %1303 = vst.msk [vmem:[#allocation2 + $0x44] sm:$0xf] %vm1285, %v1224
        %1304 = vst.msk [vmem:[#allocation2 + $0x48] sm:$0xf] %vm1285, %v1226
        %1305 = vst.msk [vmem:[#allocation2 + $0x4c] sm:$0xf] %vm1285, %v1228
        %1306 = vst.msk [vmem:[#allocation2 + $0x50] sm:$0xf] %vm1285, %v1230
        %1307 = vst.msk [vmem:[#allocation2 + $0x54] sm:$0xf] %vm1285, %v1232
        %1308 = vst.msk [vmem:[#allocation2 + $0x58] sm:$0xf] %vm1285, %v1234
        %1309 = vst.msk [vmem:[#allocation2 + $0x5c] sm:$0xf] %vm1285, %v1236
        %1310 = vst.msk [vmem:[#allocation2 + $0x60] sm:$0xf] %vm1285, %v1238
        %1311 = vst.msk [vmem:[#allocation2 + $0x64] sm:$0xf] %vm1285, %v1240
        %1312 = vst.msk [vmem:[#allocation2 + $0x68] sm:$0xf] %vm1285, %v1242
        %1313 = vst.msk [vmem:[#allocation2 + $0x6c] sm:$0xf] %vm1285, %v1244
        %1314 = vst.msk [vmem:[#allocation2 + $0x70] sm:$0xf] %vm1285, %v1246
        %1315 = vst.msk [vmem:[#allocation2 + $0x74] sm:$0xf] %vm1285, %v1248
        %1316 = vst.msk [vmem:[#allocation2 + $0x78] sm:$0xf] %vm1285, %v1250
        %1317 = vst.msk [vmem:[#allocation2 + $0x7c] sm:$0xf] %vm1285, %v1252
        %v1319 = vshrl.u32 %v340, 16
        %v1321 = vrot.slane %v1319, 4
        %v1322 = vshll.u32 %v340, 16
        %v1324 = vrot.slane %v1322, 5
        %v1325 = vor.u32 %v1321, %v1324
        %v1326 = vrot.slane %v1325, 4
        %v1328 = vshll.u32 %v341, 16
        %v1330 = vrot.slane %v1328, 5
        %v1331 = vsel %vm381, %v1326, %v1330
        %v1332 = vshrl.u32 %v341, 16
        %v1334 = vrot.slane %v1332, 4
        %v1335 = vor.u32 %v1334, %v1330
        %v1336 = vrot.slane %v1335, 4
        %v1338 = vshll.u32 %v342, 16
        %v1340 = vrot.slane %v1338, 5
        %v1341 = vsel %vm381, %v1336, %v1340
        %1342 = vrot.lane.b32.xlu0 %v419, 16
        %v1343 = vpop.permute.xlu0 %1342
        %1344 = vrot.lane.b32.xlu0 %v429, 16
        %v1345 = vpop.permute.xlu0 %1344
        %1346 = vrot.lane.b32.xlu0 %v443, 16
        %v1347 = vpop.permute.xlu0 %1346
        %1348 = vrot.lane.b32.xlu0 %v453, 16
        %v1349 = vpop.permute.xlu0 %1348
        %1350 = vrot.lane.b32.xlu0 %v467, 16
        %v1351 = vpop.permute.xlu0 %1350
        %1352 = vrot.lane.b32.xlu0 %v477, 16
        %v1353 = vpop.permute.xlu0 %1352
        %1354 = vrot.lane.b32.xlu0 %v491, 16
        %v1355 = vpop.permute.xlu0 %1354
        %1356 = vrot.lane.b32.xlu0 %v501, 16
        %v1357 = vpop.permute.xlu0 %1356
        %1358 = vrot.lane.b32.xlu0 %v515, 16
        %v1359 = vpop.permute.xlu0 %1358
        %1360 = vrot.lane.b32.xlu0 %v525, 16
        %v1361 = vpop.permute.xlu0 %1360
        %1362 = vrot.lane.b32.xlu0 %v539, 16
        %v1363 = vpop.permute.xlu0 %1362
        %1364 = vrot.lane.b32.xlu0 %v549, 16
        %v1365 = vpop.permute.xlu0 %1364
        %1366 = vrot.lane.b32.xlu0 %v563, 16
        %v1367 = vpop.permute.xlu0 %1366
        %1368 = vrot.lane.b32.xlu0 %v573, 16
        %v1369 = vpop.permute.xlu0 %1368
        %1370 = vrot.lane.b32.xlu0 %v587, 16
        %v1371 = vpop.permute.xlu0 %1370
        %1372 = vrot.lane.b32.xlu0 %v597, 16
        %v1373 = vpop.permute.xlu0 %1372
        %1374 = vrot.lane.b32.xlu0 %v611, 16
        %v1375 = vpop.permute.xlu0 %1374
        %1376 = vrot.lane.b32.xlu0 %v621, 16
        %v1377 = vpop.permute.xlu0 %1376
        %1378 = vrot.lane.b32.xlu0 %v635, 16
        %v1379 = vpop.permute.xlu0 %1378
        %1380 = vrot.lane.b32.xlu0 %v645, 16
        %v1381 = vpop.permute.xlu0 %1380
        %1382 = vrot.lane.b32.xlu0 %v659, 16
        %v1383 = vpop.permute.xlu0 %1382
        %1384 = vrot.lane.b32.xlu0 %v669, 16
        %v1385 = vpop.permute.xlu0 %1384
        %1386 = vrot.lane.b32.xlu0 %v683, 16
        %v1387 = vpop.permute.xlu0 %1386
        %1388 = vrot.lane.b32.xlu0 %v693, 16
        %v1389 = vpop.permute.xlu0 %1388
        %1390 = vrot.lane.b32.xlu0 %v707, 16
        %v1391 = vpop.permute.xlu0 %1390
        %1392 = vrot.lane.b32.xlu0 %v717, 16
        %v1393 = vpop.permute.xlu0 %1392
        %1394 = vrot.lane.b32.xlu0 %v731, 16
        %v1395 = vpop.permute.xlu0 %1394
        %1396 = vrot.lane.b32.xlu0 %v741, 16
        %v1397 = vpop.permute.xlu0 %1396
        %1398 = vrot.lane.b32.xlu0 %v755, 16
        %v1399 = vpop.permute.xlu0 %1398
        %1400 = vrot.lane.b32.xlu0 %v765, 16
        %v1401 = vpop.permute.xlu0 %1400
        %1402 = vrot.lane.b32.xlu0 %v1331, 16
        %v1403 = vpop.permute.xlu0 %1402
        %1404 = vrot.lane.b32.xlu0 %v1341, 16
        %v1405 = vpop.permute.xlu0 %1404
        %vm1438 = vcmask 158848
        %1439 = vst.msk [vmem:[#allocation2] sm:$0xf] %vm1438, %v1343
        %1440 = vst.msk [vmem:[#allocation2 + $0x4] sm:$0xf] %vm1438, %v1345
        %1441 = vst.msk [vmem:[#allocation2 + $0x8] sm:$0xf] %vm1438, %v1347
        %1442 = vst.msk [vmem:[#allocation2 + $0xc] sm:$0xf] %vm1438, %v1349
        %1443 = vst.msk [vmem:[#allocation2 + $0x10] sm:$0xf] %vm1438, %v1351
        %1444 = vst.msk [vmem:[#allocation2 + $0x14] sm:$0xf] %vm1438, %v1353
        %1445 = vst.msk [vmem:[#allocation2 + $0x18] sm:$0xf] %vm1438, %v1355
        %1446 = vst.msk [vmem:[#allocation2 + $0x1c] sm:$0xf] %vm1438, %v1357
        %1447 = vst.msk [vmem:[#allocation2 + $0x20] sm:$0xf] %vm1438, %v1359
        %1448 = vst.msk [vmem:[#allocation2 + $0x24] sm:$0xf] %vm1438, %v1361
        %1449 = vst.msk [vmem:[#allocation2 + $0x28] sm:$0xf] %vm1438, %v1363
        %1450 = vst.msk [vmem:[#allocation2 + $0x2c] sm:$0xf] %vm1438, %v1365
        %1451 = vst.msk [vmem:[#allocation2 + $0x30] sm:$0xf] %vm1438, %v1367
        %1452 = vst.msk [vmem:[#allocation2 + $0x34] sm:$0xf] %vm1438, %v1369
        %1453 = vst.msk [vmem:[#allocation2 + $0x38] sm:$0xf] %vm1438, %v1371
        %1454 = vst.msk [vmem:[#allocation2 + $0x3c] sm:$0xf] %vm1438, %v1373
        %1455 = vst.msk [vmem:[#allocation2 + $0x40] sm:$0xf] %vm1438, %v1375
        %1456 = vst.msk [vmem:[#allocation2 + $0x44] sm:$0xf] %vm1438, %v1377
        %1457 = vst.msk [vmem:[#allocation2 + $0x48] sm:$0xf] %vm1438, %v1379
        %1458 = vst.msk [vmem:[#allocation2 + $0x4c] sm:$0xf] %vm1438, %v1381
        %1459 = vst.msk [vmem:[#allocation2 + $0x50] sm:$0xf] %vm1438, %v1383
        %1460 = vst.msk [vmem:[#allocation2 + $0x54] sm:$0xf] %vm1438, %v1385
        %1461 = vst.msk [vmem:[#allocation2 + $0x58] sm:$0xf] %vm1438, %v1387
        %1462 = vst.msk [vmem:[#allocation2 + $0x5c] sm:$0xf] %vm1438, %v1389
        %1463 = vst.msk [vmem:[#allocation2 + $0x60] sm:$0xf] %vm1438, %v1391
        %1464 = vst.msk [vmem:[#allocation2 + $0x64] sm:$0xf] %vm1438, %v1393
        %1465 = vst.msk [vmem:[#allocation2 + $0x68] sm:$0xf] %vm1438, %v1395
        %1466 = vst.msk [vmem:[#allocation2 + $0x6c] sm:$0xf] %vm1438, %v1397
        %1467 = vst.msk [vmem:[#allocation2 + $0x70] sm:$0xf] %vm1438, %v1399
        %1468 = vst.msk [vmem:[#allocation2 + $0x74] sm:$0xf] %vm1438, %v1401
        %1469 = vst.msk [vmem:[#allocation2 + $0x78] sm:$0xf] %vm1438, %v1403
        %1470 = vst.msk [vmem:[#allocation2 + $0x7c] sm:$0xf] %vm1438, %v1405
        %v1472 = vrot.slane %v340, 5
        %v1473 = vrot.slane %v1472, 4
        %v1474 = vrot.slane %v341, 5
        %v1475 = vsel %vm945, %v1473, %v1474
        %v1476 = vrot.slane %v1474, 4
        %v1477 = vrot.slane %v342, 5
        %v1478 = vsel %vm945, %v1476, %v1477
        %1479 = vrot.lane.b32.xlu0 %v956, 20
        %v1480 = vpop.permute.xlu0 %1479
        %1481 = vrot.lane.b32.xlu0 %v959, 20
        %v1482 = vpop.permute.xlu0 %1481
        %1483 = vrot.lane.b32.xlu0 %v963, 20
        %v1484 = vpop.permute.xlu0 %1483
        %1485 = vrot.lane.b32.xlu0 %v966, 20
        %v1486 = vpop.permute.xlu0 %1485
        %1487 = vrot.lane.b32.xlu0 %v970, 20
        %v1488 = vpop.permute.xlu0 %1487
        %1489 = vrot.lane.b32.xlu0 %v973, 20
        %v1490 = vpop.permute.xlu0 %1489
        %1491 = vrot.lane.b32.xlu0 %v977, 20
        %v1492 = vpop.permute.xlu0 %1491
        %1493 = vrot.lane.b32.xlu0 %v980, 20
        %v1494 = vpop.permute.xlu0 %1493
        %1495 = vrot.lane.b32.xlu0 %v984, 20
        %v1496 = vpop.permute.xlu0 %1495
        %1497 = vrot.lane.b32.xlu0 %v987, 20
        %v1498 = vpop.permute.xlu0 %1497
        %1499 = vrot.lane.b32.xlu0 %v991, 20
        %v1500 = vpop.permute.xlu0 %1499
        %1501 = vrot.lane.b32.xlu0 %v994, 20
        %v1502 = vpop.permute.xlu0 %1501
        %1503 = vrot.lane.b32.xlu0 %v998, 20
        %v1504 = vpop.permute.xlu0 %1503
        %1505 = vrot.lane.b32.xlu0 %v1001, 20
        %v1506 = vpop.permute.xlu0 %1505
        %1507 = vrot.lane.b32.xlu0 %v1005, 20
        %v1508 = vpop.permute.xlu0 %1507
        %1509 = vrot.lane.b32.xlu0 %v1008, 20
        %v1510 = vpop.permute.xlu0 %1509
        %1511 = vrot.lane.b32.xlu0 %v1012, 20
        %v1512 = vpop.permute.xlu0 %1511
        %1513 = vrot.lane.b32.xlu0 %v1015, 20
        %v1514 = vpop.permute.xlu0 %1513
        %1515 = vrot.lane.b32.xlu0 %v1019, 20
        %v1516 = vpop.permute.xlu0 %1515
        %1517 = vrot.lane.b32.xlu0 %v1022, 20
        %v1518 = vpop.permute.xlu0 %1517
        %1519 = vrot.lane.b32.xlu0 %v1026, 20
        %v1520 = vpop.permute.xlu0 %1519
        %1521 = vrot.lane.b32.xlu0 %v1029, 20
        %v1522 = vpop.permute.xlu0 %1521
        %1523 = vrot.lane.b32.xlu0 %v1033, 20
        %v1524 = vpop.permute.xlu0 %1523
        %1525 = vrot.lane.b32.xlu0 %v1036, 20
        %v1526 = vpop.permute.xlu0 %1525
        %1527 = vrot.lane.b32.xlu0 %v1040, 20
        %v1528 = vpop.permute.xlu0 %1527
        %1529 = vrot.lane.b32.xlu0 %v1043, 20
        %v1530 = vpop.permute.xlu0 %1529
        %1531 = vrot.lane.b32.xlu0 %v1047, 20
        %v1532 = vpop.permute.xlu0 %1531
        %1533 = vrot.lane.b32.xlu0 %v1050, 20
        %v1534 = vpop.permute.xlu0 %1533
        %1535 = vrot.lane.b32.xlu0 %v1054, 20
        %v1536 = vpop.permute.xlu0 %1535
        %1537 = vrot.lane.b32.xlu0 %v1057, 20
        %v1538 = vpop.permute.xlu0 %1537
        %1539 = vrot.lane.b32.xlu0 %v1475, 20
        %v1540 = vpop.permute.xlu0 %1539
        %1541 = vrot.lane.b32.xlu0 %v1478, 20
        %v1542 = vpop.permute.xlu0 %1541
        %vm1575 = vcmask 191648
        %1576 = vst.msk [vmem:[#allocation2] sm:$0xf] %vm1575, %v1480
        %1577 = vst.msk [vmem:[#allocation2 + $0x4] sm:$0xf] %vm1575, %v1482
        %1578 = vst.msk [vmem:[#allocation2 + $0x8] sm:$0xf] %vm1575, %v1484
        %1579 = vst.msk [vmem:[#allocation2 + $0xc] sm:$0xf] %vm1575, %v1486
        %1580 = vst.msk [vmem:[#allocation2 + $0x10] sm:$0xf] %vm1575, %v1488
        %1581 = vst.msk [vmem:[#allocation2 + $0x14] sm:$0xf] %vm1575, %v1490
        %1582 = vst.msk [vmem:[#allocation2 + $0x18] sm:$0xf] %vm1575, %v1492
        %1583 = vst.msk [vmem:[#allocation2 + $0x1c] sm:$0xf] %vm1575, %v1494
        %1584 = vst.msk [vmem:[#allocation2 + $0x20] sm:$0xf] %vm1575, %v1496
        %1585 = vst.msk [vmem:[#allocation2 + $0x24] sm:$0xf] %vm1575, %v1498
        %1586 = vst.msk [vmem:[#allocation2 + $0x28] sm:$0xf] %vm1575, %v1500
        %1587 = vst.msk [vmem:[#allocation2 + $0x2c] sm:$0xf] %vm1575, %v1502
        %1588 = vst.msk [vmem:[#allocation2 + $0x30] sm:$0xf] %vm1575, %v1504
        %1589 = vst.msk [vmem:[#allocation2 + $0x34] sm:$0xf] %vm1575, %v1506
        %1590 = vst.msk [vmem:[#allocation2 + $0x38] sm:$0xf] %vm1575, %v1508
        %1591 = vst.msk [vmem:[#allocation2 + $0x3c] sm:$0xf] %vm1575, %v1510
        %1592 = vst.msk [vmem:[#allocation2 + $0x40] sm:$0xf] %vm1575, %v1512
        %1593 = vst.msk [vmem:[#allocation2 + $0x44] sm:$0xf] %vm1575, %v1514
        %1594 = vst.msk [vmem:[#allocation2 + $0x48] sm:$0xf] %vm1575, %v1516
        %1595 = vst.msk [vmem:[#allocation2 + $0x4c] sm:$0xf] %vm1575, %v1518
        %1596 = vst.msk [vmem:[#allocation2 + $0x50] sm:$0xf] %vm1575, %v1520
        %1597 = vst.msk [vmem:[#allocation2 + $0x54] sm:$0xf] %vm1575, %v1522
        %1598 = vst.msk [vmem:[#allocation2 + $0x58] sm:$0xf] %vm1575, %v1524
        %1599 = vst.msk [vmem:[#allocation2 + $0x5c] sm:$0xf] %vm1575, %v1526
        %1600 = vst.msk [vmem:[#allocation2 + $0x60] sm:$0xf] %vm1575, %v1528
        %1601 = vst.msk [vmem:[#allocation2 + $0x64] sm:$0xf] %vm1575, %v1530
        %1602 = vst.msk [vmem:[#allocation2 + $0x68] sm:$0xf] %vm1575, %v1532
        %1603 = vst.msk [vmem:[#allocation2 + $0x6c] sm:$0xf] %vm1575, %v1534
        %1604 = vst.msk [vmem:[#allocation2 + $0x70] sm:$0xf] %vm1575, %v1536
        %1605 = vst.msk [vmem:[#allocation2 + $0x74] sm:$0xf] %vm1575, %v1538
        %1606 = vst.msk [vmem:[#allocation2 + $0x78] sm:$0xf] %vm1575, %v1540
        %1607 = vst.msk [vmem:[#allocation2 + $0x7c] sm:$0xf] %vm1575, %v1542
        %1610 = vrot.lane.b32.xlu0 %v298, 24
        %v1611 = vpop.permute.xlu0 %1610
        %1612 = vrot.lane.b32.xlu0 %v299, 24
        %v1613 = vpop.permute.xlu0 %1612
        %1614 = vrot.lane.b32.xlu0 %v301, 24
        %v1615 = vpop.permute.xlu0 %1614
        %1616 = vrot.lane.b32.xlu0 %v302, 24
        %v1617 = vpop.permute.xlu0 %1616
        %1618 = vrot.lane.b32.xlu0 %v304, 24
        %v1619 = vpop.permute.xlu0 %1618
        %1620 = vrot.lane.b32.xlu0 %v305, 24
        %v1621 = vpop.permute.xlu0 %1620
        %1622 = vrot.lane.b32.xlu0 %v307, 24
        %v1623 = vpop.permute.xlu0 %1622
        %1624 = vrot.lane.b32.xlu0 %v308, 24
        %v1625 = vpop.permute.xlu0 %1624
        %1626 = vrot.lane.b32.xlu0 %v310, 24
        %v1627 = vpop.permute.xlu0 %1626
        %1628 = vrot.lane.b32.xlu0 %v311, 24
        %v1629 = vpop.permute.xlu0 %1628
        %1630 = vrot.lane.b32.xlu0 %v313, 24
        %v1631 = vpop.permute.xlu0 %1630
        %1632 = vrot.lane.b32.xlu0 %v314, 24
        %v1633 = vpop.permute.xlu0 %1632
        %1634 = vrot.lane.b32.xlu0 %v316, 24
        %v1635 = vpop.permute.xlu0 %1634
        %1636 = vrot.lane.b32.xlu0 %v317, 24
        %v1637 = vpop.permute.xlu0 %1636
        %1638 = vrot.lane.b32.xlu0 %v319, 24
        %v1639 = vpop.permute.xlu0 %1638
        %1640 = vrot.lane.b32.xlu0 %v320, 24
        %v1641 = vpop.permute.xlu0 %1640
        %1642 = vrot.lane.b32.xlu0 %v322, 24
        %v1643 = vpop.permute.xlu0 %1642
        %1644 = vrot.lane.b32.xlu0 %v323, 24
        %v1645 = vpop.permute.xlu0 %1644
        %1646 = vrot.lane.b32.xlu0 %v325, 24
        %v1647 = vpop.permute.xlu0 %1646
        %1648 = vrot.lane.b32.xlu0 %v326, 24
        %v1649 = vpop.permute.xlu0 %1648
        %1650 = vrot.lane.b32.xlu0 %v328, 24
        %v1651 = vpop.permute.xlu0 %1650
        %1652 = vrot.lane.b32.xlu0 %v329, 24
        %v1653 = vpop.permute.xlu0 %1652
        %1654 = vrot.lane.b32.xlu0 %v331, 24
        %v1655 = vpop.permute.xlu0 %1654
        %1656 = vrot.lane.b32.xlu0 %v332, 24
        %v1657 = vpop.permute.xlu0 %1656
        %1658 = vrot.lane.b32.xlu0 %v334, 24
        %v1659 = vpop.permute.xlu0 %1658
        %1660 = vrot.lane.b32.xlu0 %v335, 24
        %v1661 = vpop.permute.xlu0 %1660
        %1662 = vrot.lane.b32.xlu0 %v337, 24
        %v1663 = vpop.permute.xlu0 %1662
        %1664 = vrot.lane.b32.xlu0 %v338, 24
        %v1665 = vpop.permute.xlu0 %1664
        %1666 = vrot.lane.b32.xlu0 %v340, 24
        %v1667 = vpop.permute.xlu0 %1666
        %1668 = vrot.lane.b32.xlu0 %v341, 24
        %v1669 = vpop.permute.xlu0 %1668
        %1670 = vrot.lane.b32.xlu0 %v343, 24
        %v1671 = vpop.permute.xlu0 %1670
        %1672 = vrot.lane.b32.xlu0 %v344, 24
        %v1673 = vpop.permute.xlu0 %1672
        %vm1706 = vcmask 224448
        %1707 = vst.msk [vmem:[#allocation2] sm:$0xf] %vm1706, %v1611
        %1708 = vst.msk [vmem:[#allocation2 + $0x4] sm:$0xf] %vm1706, %v1613
        %1709 = vst.msk [vmem:[#allocation2 + $0x8] sm:$0xf] %vm1706, %v1615
        %1710 = vst.msk [vmem:[#allocation2 + $0xc] sm:$0xf] %vm1706, %v1617
        %1711 = vst.msk [vmem:[#allocation2 + $0x10] sm:$0xf] %vm1706, %v1619
        %1712 = vst.msk [vmem:[#allocation2 + $0x14] sm:$0xf] %vm1706, %v1621
        %1713 = vst.msk [vmem:[#allocation2 + $0x18] sm:$0xf] %vm1706, %v1623
        %1714 = vst.msk [vmem:[#allocation2 + $0x1c] sm:$0xf] %vm1706, %v1625
        %1715 = vst.msk [vmem:[#allocation2 + $0x20] sm:$0xf] %vm1706, %v1627
        %1716 = vst.msk [vmem:[#allocation2 + $0x24] sm:$0xf] %vm1706, %v1629
        %1717 = vst.msk [vmem:[#allocation2 + $0x28] sm:$0xf] %vm1706, %v1631
        %1718 = vst.msk [vmem:[#allocation2 + $0x2c] sm:$0xf] %vm1706, %v1633
        %1719 = vst.msk [vmem:[#allocation2 + $0x30] sm:$0xf] %vm1706, %v1635
        %1720 = vst.msk [vmem:[#allocation2 + $0x34] sm:$0xf] %vm1706, %v1637
        %1721 = vst.msk [vmem:[#allocation2 + $0x38] sm:$0xf] %vm1706, %v1639
        %1722 = vst.msk [vmem:[#allocation2 + $0x3c] sm:$0xf] %vm1706, %v1641
        %1723 = vst.msk [vmem:[#allocation2 + $0x40] sm:$0xf] %vm1706, %v1643
        %1724 = vst.msk [vmem:[#allocation2 + $0x44] sm:$0xf] %vm1706, %v1645
        %1725 = vst.msk [vmem:[#allocation2 + $0x48] sm:$0xf] %vm1706, %v1647
        %1726 = vst.msk [vmem:[#allocation2 + $0x4c] sm:$0xf] %vm1706, %v1649
        %1727 = vst.msk [vmem:[#allocation2 + $0x50] sm:$0xf] %vm1706, %v1651
        %1728 = vst.msk [vmem:[#allocation2 + $0x54] sm:$0xf] %vm1706, %v1653
        %1729 = vst.msk [vmem:[#allocation2 + $0x58] sm:$0xf] %vm1706, %v1655
        %1730 = vst.msk [vmem:[#allocation2 + $0x5c] sm:$0xf] %vm1706, %v1657
        %1731 = vst.msk [vmem:[#allocation2 + $0x60] sm:$0xf] %vm1706, %v1659
        %1732 = vst.msk [vmem:[#allocation2 + $0x64] sm:$0xf] %vm1706, %v1661
        %1733 = vst.msk [vmem:[#allocation2 + $0x68] sm:$0xf] %vm1706, %v1663
        %1734 = vst.msk [vmem:[#allocation2 + $0x6c] sm:$0xf] %vm1706, %v1665
        %1735 = vst.msk [vmem:[#allocation2 + $0x70] sm:$0xf] %vm1706, %v1667
        %1736 = vst.msk [vmem:[#allocation2 + $0x74] sm:$0xf] %vm1706, %v1669
        %1737 = vst.msk [vmem:[#allocation2 + $0x78] sm:$0xf] %vm1706, %v1671
        %1738 = vst.msk [vmem:[#allocation2 + $0x7c] sm:$0xf] %vm1706, %v1673
        %v1740 = vshrl.u32 %v343, 16
        %v1742 = vrot.slane %v1740, 4
        %v1743 = vshll.u32 %v343, 16
        %v1745 = vrot.slane %v1743, 5
        %v1746 = vor.u32 %v1742, %v1745
        %v1747 = vrot.slane %v1746, 4
        %v1749 = vshll.u32 %v344, 16
        %v1751 = vrot.slane %v1749, 5
        %v1752 = vsel %vm381, %v1747, %v1751
        %v1753 = vshrl.u32 %v344, 16
        %v1755 = vrot.slane %v1753, 4
        %v1756 = vor.u32 %v1755, %v1751
        %v1757 = vrot.slane %v1756, 4
        %v1759 = vshll.u32 %v345, 16
        %v1761 = vrot.slane %v1759, 5
        %v1762 = vsel %vm381, %v1757, %v1761
        %1763 = vrot.lane.b32.xlu0 %v443, 28
        %v1764 = vpop.permute.xlu0 %1763
        %1765 = vrot.lane.b32.xlu0 %v453, 28
        %v1766 = vpop.permute.xlu0 %1765
        %1767 = vrot.lane.b32.xlu0 %v467, 28
        %v1768 = vpop.permute.xlu0 %1767
        %1769 = vrot.lane.b32.xlu0 %v477, 28
        %v1770 = vpop.permute.xlu0 %1769
        %1771 = vrot.lane.b32.xlu0 %v491, 28
        %v1772 = vpop.permute.xlu0 %1771
        %1773 = vrot.lane.b32.xlu0 %v501, 28
        %v1774 = vpop.permute.xlu0 %1773
        %1775 = vrot.lane.b32.xlu0 %v515, 28
        %v1776 = vpop.permute.xlu0 %1775
        %1777 = vrot.lane.b32.xlu0 %v525, 28
        %v1778 = vpop.permute.xlu0 %1777
        %1779 = vrot.lane.b32.xlu0 %v539, 28
        %v1780 = vpop.permute.xlu0 %1779
        %1781 = vrot.lane.b32.xlu0 %v549, 28
        %v1782 = vpop.permute.xlu0 %1781
        %1783 = vrot.lane.b32.xlu0 %v563, 28
        %v1784 = vpop.permute.xlu0 %1783
        %1785 = vrot.lane.b32.xlu0 %v573, 28
        %v1786 = vpop.permute.xlu0 %1785
        %1787 = vrot.lane.b32.xlu0 %v587, 28
        %v1788 = vpop.permute.xlu0 %1787
        %1789 = vrot.lane.b32.xlu0 %v597, 28
        %v1790 = vpop.permute.xlu0 %1789
        %1791 = vrot.lane.b32.xlu0 %v611, 28
        %v1792 = vpop.permute.xlu0 %1791
        %1793 = vrot.lane.b32.xlu0 %v621, 28
        %v1794 = vpop.permute.xlu0 %1793
        %1795 = vrot.lane.b32.xlu0 %v635, 28
        %v1796 = vpop.permute.xlu0 %1795
        %1797 = vrot.lane.b32.xlu0 %v645, 28
        %v1798 = vpop.permute.xlu0 %1797
        %1799 = vrot.lane.b32.xlu0 %v659, 28
        %v1800 = vpop.permute.xlu0 %1799
        %1801 = vrot.lane.b32.xlu0 %v669, 28
        %v1802 = vpop.permute.xlu0 %1801
        %1803 = vrot.lane.b32.xlu0 %v683, 28
        %v1804 = vpop.permute.xlu0 %1803
        %1805 = vrot.lane.b32.xlu0 %v693, 28
        %v1806 = vpop.permute.xlu0 %1805
        %1807 = vrot.lane.b32.xlu0 %v707, 28
        %v1808 = vpop.permute.xlu0 %1807
        %1809 = vrot.lane.b32.xlu0 %v717, 28
        %v1810 = vpop.permute.xlu0 %1809
        %1811 = vrot.lane.b32.xlu0 %v731, 28
        %v1812 = vpop.permute.xlu0 %1811
        %1813 = vrot.lane.b32.xlu0 %v741, 28
        %v1814 = vpop.permute.xlu0 %1813
        %1815 = vrot.lane.b32.xlu0 %v755, 28
        %v1816 = vpop.permute.xlu0 %1815
        %1817 = vrot.lane.b32.xlu0 %v765, 28
        %v1818 = vpop.permute.xlu0 %1817
        %1819 = vrot.lane.b32.xlu0 %v1331, 28
        %v1820 = vpop.permute.xlu0 %1819
        %1821 = vrot.lane.b32.xlu0 %v1341, 28
        %v1822 = vpop.permute.xlu0 %1821
        %1823 = vrot.lane.b32.xlu0 %v1752, 28
        %v1824 = vpop.permute.xlu0 %1823
        %1825 = vrot.lane.b32.xlu0 %v1762, 28
        %v1826 = vpop.permute.xlu0 %1825
        %vm1859 = vcmask 257248
        %1860 = vst.msk [vmem:[#allocation2] sm:$0xf] %vm1859, %v1764
        %1861 = vst.msk [vmem:[#allocation2 + $0x4] sm:$0xf] %vm1859, %v1766
        %1862 = vst.msk [vmem:[#allocation2 + $0x8] sm:$0xf] %vm1859, %v1768
        %1863 = vst.msk [vmem:[#allocation2 + $0xc] sm:$0xf] %vm1859, %v1770
        %1864 = vst.msk [vmem:[#allocation2 + $0x10] sm:$0xf] %vm1859, %v1772
        %1865 = vst.msk [vmem:[#allocation2 + $0x14] sm:$0xf] %vm1859, %v1774
        %1866 = vst.msk [vmem:[#allocation2 + $0x18] sm:$0xf] %vm1859, %v1776
        %1867 = vst.msk [vmem:[#allocation2 + $0x1c] sm:$0xf] %vm1859, %v1778
        %1868 = vst.msk [vmem:[#allocation2 + $0x20] sm:$0xf] %vm1859, %v1780
        %1869 = vst.msk [vmem:[#allocation2 + $0x24] sm:$0xf] %vm1859, %v1782
        %1870 = vst.msk [vmem:[#allocation2 + $0x28] sm:$0xf] %vm1859, %v1784
        %1871 = vst.msk [vmem:[#allocation2 + $0x2c] sm:$0xf] %vm1859, %v1786
        %1872 = vst.msk [vmem:[#allocation2 + $0x30] sm:$0xf] %vm1859, %v1788
        %1873 = vst.msk [vmem:[#allocation2 + $0x34] sm:$0xf] %vm1859, %v1790
        %1874 = vst.msk [vmem:[#allocation2 + $0x38] sm:$0xf] %vm1859, %v1792
        %1875 = vst.msk [vmem:[#allocation2 + $0x3c] sm:$0xf] %vm1859, %v1794
        %1876 = vst.msk [vmem:[#allocation2 + $0x40] sm:$0xf] %vm1859, %v1796
        %1877 = vst.msk [vmem:[#allocation2 + $0x44] sm:$0xf] %vm1859, %v1798
        %1878 = vst.msk [vmem:[#allocation2 + $0x48] sm:$0xf] %vm1859, %v1800
        %1879 = vst.msk [vmem:[#allocation2 + $0x4c] sm:$0xf] %vm1859, %v1802
        %1880 = vst.msk [vmem:[#allocation2 + $0x50] sm:$0xf] %vm1859, %v1804
        %1881 = vst.msk [vmem:[#allocation2 + $0x54] sm:$0xf] %vm1859, %v1806
        %1882 = vst.msk [vmem:[#allocation2 + $0x58] sm:$0xf] %vm1859, %v1808
        %1883 = vst.msk [vmem:[#allocation2 + $0x5c] sm:$0xf] %vm1859, %v1810
        %1884 = vst.msk [vmem:[#allocation2 + $0x60] sm:$0xf] %vm1859, %v1812
        %1885 = vst.msk [vmem:[#allocation2 + $0x64] sm:$0xf] %vm1859, %v1814
        %1886 = vst.msk [vmem:[#allocation2 + $0x68] sm:$0xf] %vm1859, %v1816
        %1887 = vst.msk [vmem:[#allocation2 + $0x6c] sm:$0xf] %vm1859, %v1818
        %1888 = vst.msk [vmem:[#allocation2 + $0x70] sm:$0xf] %vm1859, %v1820
        %1889 = vst.msk [vmem:[#allocation2 + $0x74] sm:$0xf] %vm1859, %v1822
        %1890 = vst.msk [vmem:[#allocation2 + $0x78] sm:$0xf] %vm1859, %v1824
        %1891 = vst.msk [vmem:[#allocation2 + $0x7c] sm:$0xf] %vm1859, %v1826
        %v1893 = vrot.slane %v343, 5
        %v1894 = vrot.slane %v1893, 4
        %v1895 = vrot.slane %v344, 5
        %v1896 = vsel %vm945, %v1894, %v1895
        %v1897 = vrot.slane %v1895, 4
        %v1898 = vrot.slane %v345, 5
        %v1899 = vsel %vm945, %v1897, %v1898
        %1900 = vrot.lane.b32.xlu0 %v963, 32
        %v1901 = vpop.permute.xlu0 %1900
        %1902 = vrot.lane.b32.xlu0 %v966, 32
        %v1903 = vpop.permute.xlu0 %1902
        %1904 = vrot.lane.b32.xlu0 %v970, 32
        %v1905 = vpop.permute.xlu0 %1904
        %1906 = vrot.lane.b32.xlu0 %v973, 32
        %v1907 = vpop.permute.xlu0 %1906
        %1908 = vrot.lane.b32.xlu0 %v977, 32
        %v1909 = vpop.permute.xlu0 %1908
        %1910 = vrot.lane.b32.xlu0 %v980, 32
        %v1911 = vpop.permute.xlu0 %1910
        %1912 = vrot.lane.b32.xlu0 %v984, 32
        %v1913 = vpop.permute.xlu0 %1912
        %1914 = vrot.lane.b32.xlu0 %v987, 32
        %v1915 = vpop.permute.xlu0 %1914
        %1916 = vrot.lane.b32.xlu0 %v991, 32
        %v1917 = vpop.permute.xlu0 %1916
        %1918 = vrot.lane.b32.xlu0 %v994, 32
        %v1919 = vpop.permute.xlu0 %1918
        %1920 = vrot.lane.b32.xlu0 %v998, 32
        %v1921 = vpop.permute.xlu0 %1920
        %1922 = vrot.lane.b32.xlu0 %v1001, 32
        %v1923 = vpop.permute.xlu0 %1922
        %1924 = vrot.lane.b32.xlu0 %v1005, 32
        %v1925 = vpop.permute.xlu0 %1924
        %1926 = vrot.lane.b32.xlu0 %v1008, 32
        %v1927 = vpop.permute.xlu0 %1926
        %1928 = vrot.lane.b32.xlu0 %v1012, 32
        %v1929 = vpop.permute.xlu0 %1928
        %1930 = vrot.lane.b32.xlu0 %v1015, 32
        %v1931 = vpop.permute.xlu0 %1930
        %1932 = vrot.lane.b32.xlu0 %v1019, 32
        %v1933 = vpop.permute.xlu0 %1932
        %1934 = vrot.lane.b32.xlu0 %v1022, 32
        %v1935 = vpop.permute.xlu0 %1934
        %1936 = vrot.lane.b32.xlu0 %v1026, 32
        %v1937 = vpop.permute.xlu0 %1936
        %1938 = vrot.lane.b32.xlu0 %v1029, 32
        %v1939 = vpop.permute.xlu0 %1938
        %1940 = vrot.lane.b32.xlu0 %v1033, 32
        %v1941 = vpop.permute.xlu0 %1940
        %1942 = vrot.lane.b32.xlu0 %v1036, 32
        %v1943 = vpop.permute.xlu0 %1942
        %1944 = vrot.lane.b32.xlu0 %v1040, 32
        %v1945 = vpop.permute.xlu0 %1944
        %1946 = vrot.lane.b32.xlu0 %v1043, 32
        %v1947 = vpop.permute.xlu0 %1946
        %1948 = vrot.lane.b32.xlu0 %v1047, 32
        %v1949 = vpop.permute.xlu0 %1948
        %1950 = vrot.lane.b32.xlu0 %v1050, 32
        %v1951 = vpop.permute.xlu0 %1950
        %1952 = vrot.lane.b32.xlu0 %v1054, 32
        %v1953 = vpop.permute.xlu0 %1952
        %1954 = vrot.lane.b32.xlu0 %v1057, 32
        %v1955 = vpop.permute.xlu0 %1954
        %1956 = vrot.lane.b32.xlu0 %v1475, 32
        %v1957 = vpop.permute.xlu0 %1956
        %1958 = vrot.lane.b32.xlu0 %v1478, 32
        %v1959 = vpop.permute.xlu0 %1958
        %1960 = vrot.lane.b32.xlu0 %v1896, 32
        %v1961 = vpop.permute.xlu0 %1960
        %1962 = vrot.lane.b32.xlu0 %v1899, 32
        %v1963 = vpop.permute.xlu0 %1962
        %vm1996 = vcmask 290048
        %1997 = vst.msk [vmem:[#allocation2] sm:$0xf] %vm1996, %v1901
        %1998 = vst.msk [vmem:[#allocation2 + $0x4] sm:$0xf] %vm1996, %v1903
        %1999 = vst.msk [vmem:[#allocation2 + $0x8] sm:$0xf] %vm1996, %v1905
        %2000 = vst.msk [vmem:[#allocation2 + $0xc] sm:$0xf] %vm1996, %v1907
        %2001 = vst.msk [vmem:[#allocation2 + $0x10] sm:$0xf] %vm1996, %v1909
        %2002 = vst.msk [vmem:[#allocation2 + $0x14] sm:$0xf] %vm1996, %v1911
        %2003 = vst.msk [vmem:[#allocation2 + $0x18] sm:$0xf] %vm1996, %v1913
        %2004 = vst.msk [vmem:[#allocation2 + $0x1c] sm:$0xf] %vm1996, %v1915
        %2005 = vst.msk [vmem:[#allocation2 + $0x20] sm:$0xf] %vm1996, %v1917
        %2006 = vst.msk [vmem:[#allocation2 + $0x24] sm:$0xf] %vm1996, %v1919
        %2007 = vst.msk [vmem:[#allocation2 + $0x28] sm:$0xf] %vm1996, %v1921
        %2008 = vst.msk [vmem:[#allocation2 + $0x2c] sm:$0xf] %vm1996, %v1923
        %2009 = vst.msk [vmem:[#allocation2 + $0x30] sm:$0xf] %vm1996, %v1925
        %2010 = vst.msk [vmem:[#allocation2 + $0x34] sm:$0xf] %vm1996, %v1927
        %2011 = vst.msk [vmem:[#allocation2 + $0x38] sm:$0xf] %vm1996, %v1929
        %2012 = vst.msk [vmem:[#allocation2 + $0x3c] sm:$0xf] %vm1996, %v1931
        %2013 = vst.msk [vmem:[#allocation2 + $0x40] sm:$0xf] %vm1996, %v1933
        %2014 = vst.msk [vmem:[#allocation2 + $0x44] sm:$0xf] %vm1996, %v1935
        %2015 = vst.msk [vmem:[#allocation2 + $0x48] sm:$0xf] %vm1996, %v1937
        %2016 = vst.msk [vmem:[#allocation2 + $0x4c] sm:$0xf] %vm1996, %v1939
        %2017 = vst.msk [vmem:[#allocation2 + $0x50] sm:$0xf] %vm1996, %v1941
        %2018 = vst.msk [vmem:[#allocation2 + $0x54] sm:$0xf] %vm1996, %v1943
        %2019 = vst.msk [vmem:[#allocation2 + $0x58] sm:$0xf] %vm1996, %v1945
        %2020 = vst.msk [vmem:[#allocation2 + $0x5c] sm:$0xf] %vm1996, %v1947
        %2021 = vst.msk [vmem:[#allocation2 + $0x60] sm:$0xf] %vm1996, %v1949
        %2022 = vst.msk [vmem:[#allocation2 + $0x64] sm:$0xf] %vm1996, %v1951
        %2023 = vst.msk [vmem:[#allocation2 + $0x68] sm:$0xf] %vm1996, %v1953
        %2024 = vst.msk [vmem:[#allocation2 + $0x6c] sm:$0xf] %vm1996, %v1955
        %2025 = vst.msk [vmem:[#allocation2 + $0x70] sm:$0xf] %vm1996, %v1957
        %2026 = vst.msk [vmem:[#allocation2 + $0x74] sm:$0xf] %vm1996, %v1959
        %2027 = vst.msk [vmem:[#allocation2 + $0x78] sm:$0xf] %vm1996, %v1961
        %2028 = vst.msk [vmem:[#allocation2 + $0x7c] sm:$0xf] %vm1996, %v1963
        %v2029 = vld [vmem:[%s279] sm:$0xff]
        %v2030 = vld [vmem:[%s283] sm:$0xff]
        %2032 = vset.pattern.permute.xlu0 0
        %2033 = vperm.xlu0 %2032, %v2030
        %v2034 = vpop.permute.xlu0 %2033
        %v2036 = vmul.f32 %v2029, %v2034
        %v2037 = vpack.c.bf16 %v2036, %v2036
        %v2038 = vld [vmem:[#allocation2] sm:$0xf]
        %v2039 = vld [vmem:[#allocation2 + $0x4] sm:$0xf]
        %v2040 = vld [vmem:[#allocation2 + $0x8] sm:$0xf]
        %v2041 = vld [vmem:[#allocation2 + $0xc] sm:$0xf]
        %v2042 = vld [vmem:[#allocation2 + $0x10] sm:$0xf]
        %v2043 = vld [vmem:[#allocation2 + $0x14] sm:$0xf]
        %v2044 = vld [vmem:[#allocation2 + $0x18] sm:$0xf]
        %v2045 = vld [vmem:[#allocation2 + $0x1c] sm:$0xf]
        %v2046 = vld [vmem:[#allocation2 + $0x20] sm:$0xf]
        %v2047 = vld [vmem:[#allocation2 + $0x24] sm:$0xf]
        %v2048 = vld [vmem:[#allocation2 + $0x28] sm:$0xf]
        %v2049 = vld [vmem:[#allocation2 + $0x2c] sm:$0xf]
        %v2050 = vld [vmem:[#allocation2 + $0x30] sm:$0xf]
        %v2051 = vld [vmem:[#allocation2 + $0x34] sm:$0xf]
        %v2052 = vld [vmem:[#allocation2 + $0x38] sm:$0xf]
        %v2053 = vld [vmem:[#allocation2 + $0x3c] sm:$0xf]
        %v2054 = vld [vmem:[#allocation2 + $0x40] sm:$0xf]
        %v2055 = vld [vmem:[#allocation2 + $0x44] sm:$0xf]
        %v2056 = vld [vmem:[#allocation2 + $0x48] sm:$0xf]
        %v2057 = vld [vmem:[#allocation2 + $0x4c] sm:$0xf]
        %v2058 = vld [vmem:[#allocation2 + $0x50] sm:$0xf]
        %v2059 = vld [vmem:[#allocation2 + $0x54] sm:$0xf]
        %v2060 = vld [vmem:[#allocation2 + $0x58] sm:$0xf]
        %v2061 = vld [vmem:[#allocation2 + $0x5c] sm:$0xf]
        %v2062 = vld [vmem:[#allocation2 + $0x60] sm:$0xf]
        %v2063 = vld [vmem:[#allocation2 + $0x64] sm:$0xf]
        %v2064 = vld [vmem:[#allocation2 + $0x68] sm:$0xf]
        %v2065 = vld [vmem:[#allocation2 + $0x6c] sm:$0xf]
        %v2066 = vld [vmem:[#allocation2 + $0x70] sm:$0xf]
        %v2067 = vld [vmem:[#allocation2 + $0x74] sm:$0xf]
        %v2068 = vld [vmem:[#allocation2 + $0x78] sm:$0xf]
        %v2069 = vld [vmem:[#allocation2 + $0x7c] sm:$0xf]
        %v2102 = vunpack.c.l.b16 %v2038
        %v2103 = vunpack.c.l.b16 %v2039
        %v2104 = vunpack.c.l.b16 %v2040
        %v2105 = vunpack.c.l.b16 %v2041
        %v2106 = vunpack.c.l.b16 %v2042
        %v2107 = vunpack.c.l.b16 %v2043
        %v2108 = vunpack.c.l.b16 %v2044
        %v2109 = vunpack.c.l.b16 %v2045
        %v2110 = vunpack.c.l.b16 %v2046
        %v2111 = vunpack.c.l.b16 %v2047
        %v2112 = vunpack.c.l.b16 %v2048
        %v2113 = vunpack.c.l.b16 %v2049
        %v2114 = vunpack.c.l.b16 %v2050
        %v2115 = vunpack.c.l.b16 %v2051
        %v2116 = vunpack.c.l.b16 %v2052
        %v2117 = vunpack.c.l.b16 %v2053
        %v2118 = vunpack.c.l.b16 %v2054
        %v2119 = vunpack.c.l.b16 %v2055
        %v2120 = vunpack.c.l.b16 %v2056
        %v2121 = vunpack.c.l.b16 %v2057
        %v2122 = vunpack.c.l.b16 %v2058
        %v2123 = vunpack.c.l.b16 %v2059
        %v2124 = vunpack.c.l.b16 %v2060
        %v2125 = vunpack.c.l.b16 %v2061
        %v2126 = vunpack.c.l.b16 %v2062
        %v2127 = vunpack.c.l.b16 %v2063
        %v2128 = vunpack.c.l.b16 %v2064
        %v2129 = vunpack.c.l.b16 %v2065
        %v2130 = vunpack.c.l.b16 %v2066
        %v2131 = vunpack.c.l.b16 %v2067
        %v2132 = vunpack.c.l.b16 %v2068
        %v2133 = vunpack.c.l.b16 %v2069
        %v2134 = vpack.c.b16 %v2103, %v2102
        %v2135 = vpack.c.b16 %v2105, %v2104
        %v2136 = vpack.c.b16 %v2107, %v2106
        %v2137 = vpack.c.b16 %v2109, %v2108
        %v2138 = vpack.c.b16 %v2111, %v2110
        %v2139 = vpack.c.b16 %v2113, %v2112
        %v2140 = vpack.c.b16 %v2115, %v2114
        %v2141 = vpack.c.b16 %v2117, %v2116
        %v2142 = vpack.c.b16 %v2119, %v2118
        %v2143 = vpack.c.b16 %v2121, %v2120
        %v2144 = vpack.c.b16 %v2123, %v2122
        %v2145 = vpack.c.b16 %v2125, %v2124
        %v2146 = vpack.c.b16 %v2127, %v2126
        %v2147 = vpack.c.b16 %v2129, %v2128
        %v2148 = vpack.c.b16 %v2131, %v2130
        %v2149 = vpack.c.b16 %v2133, %v2132
        %vm2150 = vcmask 293888
        %v2152 = vsel %vm2150, %v2037, 0
        %v2155 = vsel %vm2150, %v2134, 0
        %v2158 = vsel %vm2150, %v2135, 0
        %v2161 = vsel %vm2150, %v2136, 0
        %v2164 = vsel %vm2150, %v2137, 0
        %v2167 = vsel %vm2150, %v2138, 0
        %v2170 = vsel %vm2150, %v2139, 0
        %v2173 = vsel %vm2150, %v2140, 0
        %v2176 = vsel %vm2150, %v2141, 0
        %v2179 = vsel %vm2150, %v2142, 0
        %v2182 = vsel %vm2150, %v2143, 0
        %v2185 = vsel %vm2150, %v2144, 0
        %v2188 = vsel %vm2150, %v2145, 0
        %v2191 = vsel %vm2150, %v2146, 0
        %v2194 = vsel %vm2150, %v2147, 0
        %v2197 = vsel %vm2150, %v2148, 0
        %v2200 = vsel %vm2150, %v2149, 0
        %2202 = vmatpush.bf16.xpose.msra.mxu0 %v2176
        %2203 = vmatpush.bf16.xpose.msra.mxu0 %v2173
        %2204 = vmatpush.bf16.xpose.msra.mxu0 %v2170
        %2205 = vmatpush.bf16.xpose.msra.mxu0 %v2167
        %2206 = vmatpush.bf16.xpose.msra.mxu0 %v2164
        %2207 = vmatpush.bf16.xpose.msra.mxu0 %v2161
        %2208 = vmatpush.bf16.xpose.msra.mxu0 %v2158
        %2209 = vmatpush.bf16.xpose.msra.mxu0 %v2155
        %2210 = vmatmul.bf16.gmra.mxu0 %v2152
        %v2211 = vpop.f32.mrf.mxu0
        %v2212 = vadd.f32 0.0, %v2211
        %v2213 = vpop.f32.mrf.mxu0
        %2214 = vdwg.mxu0
        %2215 = vmatpush.bf16.xpose.msra.mxu0 %v2200
        %2216 = vmatpush.bf16.xpose.msra.mxu0 %v2197
        %2217 = vmatpush.bf16.xpose.msra.mxu0 %v2194
        %2218 = vmatpush.bf16.xpose.msra.mxu0 %v2191
        %2219 = vmatpush.bf16.xpose.msra.mxu0 %v2188
        %2220 = vmatpush.bf16.xpose.msra.mxu0 %v2185
        %2221 = vmatpush.bf16.xpose.msra.mxu0 %v2182
        %2222 = vmatpush.bf16.xpose.msra.mxu0 %v2179
        %2223 = vmatmul.bf16.gmra.mxu0 %v2152
        %v2224 = vpop.f32.mrf.mxu0
        %v2225 = vadd.f32 0.0, %v2224
        %v2226 = vpop.f32.mrf.mxu0
        %2227 = vdwg.mxu0
        %2228 = vst [vmem:[%s258] sm:$0xff] %v2212
        %2229 = vst [vmem:[%s258 + $0x8] sm:$0xff] %v2225
        %p2230 = scmp.eq.s32.totalorder %s25, 0
        // Predicated region
        $region33: #{tpu_custom_call.1} parent=31 // pred_check
          %p2231 = pneg %p2230
        $region34: #{tpu_custom_call.1} parent=31 // pred_check_branch
          %2233 = sbr.rel (%p2231) target = $region36
        $region35: #{tpu_custom_call.1} parent=31 // pred_region
          %vm2234 = vcmask 7168
          %2235 = vst.msk [vmem:[%s287] sm:$0xff] %vm2234, 0.0
          %2236 = vst.msk [vmem:[%s291] sm:$0xff] %vm2234, 0.0
        $region36: #{tpu_custom_call.1} parent=31 // pred_fallthru
          _
        %v2237 = vld [vmem:[%s287] sm:$0xff]
        %v2238 = vadd.f32 %v2212, %v2225
        %2239 = vadd.xlane.f32.xlu0 %v2238
        %v2240 = vpop.xlane.xlu0 %2239
        %v2241 = vadd.f32 %v2237, %v2240
        %vm2242 = vcmask 7168
        %2243 = vst.msk [vmem:[%s287] sm:$0xff] %vm2242, %v2241
        %v2244 = vld [vmem:[%s291] sm:$0xff]
        %v2245 = vmul.f32 %v2212, %v2212
        %v2246 = vmul.f32 %v2225, %v2225
        %v2247 = vadd.f32 %v2245, %v2246
        %2248 = vadd.xlane.f32.xlu0 %v2247
        %v2249 = vpop.xlane.xlu0 %2248
        %v2250 = vadd.f32 %v2244, %v2249
        %2251 = vst.msk [vmem:[%s291] sm:$0xff] %vm2242, %v2250
        %s2252 = sand.u32 %s120, 1
        %s2253 = scalar_lea.sflag [#allocation4], %s2252
        %s2254 = sand.u32 %s120, 1
        %s2255 = smul.addr %s2254, 16
        %s2256 = scalar_lea.vmem [#allocation3], %s2255
        %p2257 = scmp.lt.s32.totalorder %s24, 0
        %s2258 = scalar_select %p2257, %s24, 0
        %s2259 = smul.addr %s2258, 8
        %s2260 = scalar_lea.vmem %s4, %s2259
        %p2261 = scmp.lt.s32.totalorder %s24, 0
        %s2262 = scalar_select %p2261, %s24, 0
        %s2263 = smul.addr %s2262, 8
        %s2264 = scalar_lea.vmem %s5, %s2263
        // Predicated region
        $region37: #{tpu_custom_call.1} parent=31 // pred_check
          %p2265 = pneg %p130
        $region38: #{tpu_custom_call.1} parent=31 // pred_check_branch
          %2267 = sbr.rel (%p2265) target = $region40
        $region39: #{tpu_custom_call.1} parent=31 // pred_region
          %2269 = vsyncadd %s2253, 0
          %s2270 = smul.addr %s24, 2
          %s2271 = smul.addr %s25, 2
          %s2272 = sadd.s32 %s2270, %s2271
          %s2273 = smul.addr %s2272, 8
          %s2274 = scalar_lea.hbm %s3, %s2273
          %s2276 = sshll.u32 %s2256, 4
          %s2277 = int_to_ptr.vmem [resolvable:$true] %s2276
          %s2278 = sshll.u32 %s2274, 4
          %s2279 = int_to_ptr.hbm [resolvable:$true] %s2278
          %2281 = dma.vmem_to_hbm [thread:$0]  %s2277, 256, %s2279, %s2253
        $region40: #{tpu_custom_call.1} parent=31 // pred_fallthru
          _
        // Predicated region
        $region41: #{tpu_custom_call.1} parent=31 // pred_check
          %p2282 = pneg %p156
        $region42: #{tpu_custom_call.1} parent=31 // pred_check_branch
          %2284 = sbr.rel (%p2282) target = $region44
        $region43: #{tpu_custom_call.1} parent=31 // pred_region
          _
        $region44: #{tpu_custom_call.1} parent=31 // pred_fallthru
          _
        // Predicated region
        $region45: #{tpu_custom_call.1} parent=31 // pred_check
          %p2285 = pneg %p182
        $region46: #{tpu_custom_call.1} parent=31 // pred_check_branch
          %2287 = sbr.rel (%p2285) target = $region48
        $region47: #{tpu_custom_call.1} parent=31 // pred_region
          _
        $region48: #{tpu_custom_call.1} parent=31 // pred_fallthru
          _
        // Predicated region
        $region49: #{tpu_custom_call.1} parent=31 // pred_check
          %p2288 = pneg %p156
        $region50: #{tpu_custom_call.1} parent=31 // pred_check_branch
          %2290 = sbr.rel (%p2288) target = $region52
        $region51: #{tpu_custom_call.1} parent=31 // pred_region
          %p2291 = scmp.lt.s32.totalorder %s24, 0
          %s2292 = scalar_select %p2291, %s24, 0
          %s2293 = smul.addr %s2292, 8
          %s2294 = scalar_lea.vmem %s4, %s2293
        $region52: #{tpu_custom_call.1} parent=31 // pred_fallthru
          _
        // Predicated region
        $region53: #{tpu_custom_call.1} parent=31 // pred_check
          %p2295 = pneg %p182
        $region54: #{tpu_custom_call.1} parent=31 // pred_check_branch
          %2297 = sbr.rel (%p2295) target = $region56
        $region55: #{tpu_custom_call.1} parent=31 // pred_region
          %p2298 = scmp.lt.s32.totalorder %s24, 0
          %s2299 = scalar_select %p2298, %s24, 0
          %s2300 = smul.addr %s2299, 8
          %s2301 = scalar_lea.vmem %s5, %s2300
        $region56: #{tpu_custom_call.1} parent=31 // pred_fallthru
          _
      $region32: #{tpu_custom_call.1} parent=5 // pred_fallthru
        _
      %p2302 = scmp.le.s32.totalorder 2, %s15
      // Predicated region
      $region57: #{tpu_custom_call.1} parent=5 // pred_check
        %p2303 = pneg %p2302
      $region58: #{tpu_custom_call.1} parent=5 // pred_check_branch
        %2305 = sbr.rel (%p2303) target = $region60
      $region59: #{tpu_custom_call.1} parent=5 // pred_region
        %s2306 = ssub.s32 %s15, 2
        // Predicated region
        $region61: #{tpu_custom_call.1} parent=59 // pred_check
          %p2307 = pneg %p136
        $region62: #{tpu_custom_call.1} parent=59 // pred_check_branch
          %2309 = sbr.rel (%p2307) target = $region64
        $region63: #{tpu_custom_call.1} parent=59 // pred_region
          %s2310 = sand.u32 %s121, 1
          %s2311 = scalar_lea.sflag [#allocation4], %s2310
          %s2312 = sand.u32 %s121, 1
          %s2313 = smul.addr %s2312, 16
          %s2314 = scalar_lea.vmem [#allocation3], %s2313
          %2316 = dma.done %s2311, 256
        $region64: #{tpu_custom_call.1} parent=59 // pred_fallthru
          _
      $region60: #{tpu_custom_call.1} parent=5 // pred_fallthru
        _
    $region6: #{tpu_custom_call.1} parent=1 // loop_footer
      %s19 = sadd.s32 1, %s15
    $region7: #{tpu_custom_call.1} parent=1 // loop_footer_branch
      %14 = sbr.rel target = $region3
    $region8: #{tpu_custom_call.1} parent=1 // loop_exit
      _
    %2317 = vsyncpa [#allocation4], 1
    %s2318 = scalar_lea.sflag [#allocation4], 1
    %2319 = vsyncpa %s2318, 1

</llo_original>
